<compile_context>
chip_gen: v7x
topology: tpu7x:2x2x1
jax: 0.10.0
libtpu: 0.0.40
codegen_flags: <defaults>
</compile_context>

<pallas_src>
import jax
import jax.numpy as jnp
from jax.experimental import pallas as pl
from jax.experimental.pallas import tpu as pltpu


def _round_up(n, m):
    return ((n + m - 1) // m) * m


def fold_params(params, compute_dtype=jnp.bfloat16):
    """One-time prep (hoisted out of the per-call path): fold w_en2 into the
    top rows of w_cl1 (no nonlinearity between them) and cast weights to the
    streaming dtype.  Biases stay f32 (added to f32 accumulators in-kernel)."""
    d_en = params["w_en2"].shape[1]
    w_cl1_top = params["w_cl1"][:d_en]
    w_cl1_bot = params["w_cl1"][d_en:]
    w_a = params["w_en2"] @ w_cl1_top
    b_a = params["b_en2"] @ w_cl1_top + params["b_cl1"]
    f32 = jnp.float32
    return {
        "w1": params["w_en1"].astype(compute_dtype),
        "b1": params["b_en1"].astype(f32),
        "wa": w_a.astype(compute_dtype),
        "wb": w_cl1_bot.astype(compute_dtype),
        "ba": b_a.astype(f32),
        "w2": params["w_cl2"].astype(compute_dtype),
        "b2": params["b_cl2"].astype(f32),
    }


def _decoder_kernel(x_ref, obj_ref, w1, b1, wa, wb, ba, w2, b2, out_ref):
    cdt = w1.dtype  # streaming / MXU dtype (bf16 or f32); accumulation is f32

    # encoder first layer: Linear + ReLU (f32 accumulate, f32 bias/ReLU)
    h = jnp.dot(x_ref[...], w1[...], preferred_element_type=jnp.float32)
    h = jnp.maximum(h + b1[...], 0.0).astype(cdt)

    # fused (encoder layer 2) @ (classifier layer 1, top rows) plus the
    # flattened-object branch of the former concat as a second matmul into the
    # same f32 accumulator.
    c = jnp.dot(h, wa[...], preferred_element_type=jnp.float32)
    c = c + jnp.dot(obj_ref[...], wb[...], preferred_element_type=jnp.float32)
    c = jnp.maximum(c + ba[...], 0.0).astype(cdt)

    # classifier last layer + log_softmax over the true-width class axis
    logits = jnp.dot(c, w2[...], preferred_element_type=jnp.float32) + b2[...]
    m = jnp.max(logits, axis=1, keepdims=True)
    z = logits - m
    lse = jnp.log(jnp.sum(jnp.exp(z), axis=1, keepdims=True))
    out_ref[...] = (z - lse).astype(out_ref.dtype)


def joint_transformation_decoder(objects, img_feat, folded, *, tb=512):
    """objects: (B, n_obj, c_obj); img_feat: (B, c_in + c_obj*n_obj);
    folded: output of fold_params()."""
    B = img_feat.shape[0]
    cdt = folded["w1"].dtype

    obj_flat = objects.reshape(B, -1).astype(cdt)
    x = img_feat.astype(cdt)
    d_img = x.shape[1]
    d_obj = obj_flat.shape[1]
    c_out = folded["w2"].shape[1]

    # Batch tile: multiple of 8, no batch padding (ragged last block is
    # masked), capped so the grid has >= 2 steps for v7x's two TensorCores.
    tb = max(8, min(_round_up(tb, 8), _round_up(B, 8)))
    if B > 8:
        tb = min(tb, _round_up(pl.cdiv(B, 2), 8))
    grid = (pl.cdiv(B, tb),)

    def tile_spec(cols):
        return pl.BlockSpec((tb, cols), lambda i: (i, 0))

    def full_spec(arr):
        return pl.BlockSpec(arr.shape, lambda i: (0, 0))

    w1, b1 = folded["w1"], folded["b1"]
    wa, wb, ba = folded["wa"], folded["wb"], folded["ba"]
    w2, b2 = folded["w2"], folded["b2"]

    return pl.pallas_call(
        _decoder_kernel,
        out_shape=jax.ShapeDtypeStruct((B, c_out), jnp.float32),
        grid_spec=pltpu.PrefetchScalarGridSpec(
            num_scalar_prefetch=0,
            grid=grid,
            in_specs=[
                tile_spec(d_img), tile_spec(d_obj),
                full_spec(w1), full_spec(b1),
                full_spec(wa), full_spec(wb), full_spec(ba),
                full_spec(w2), full_spec(b2),
            ],
            out_specs=pl.BlockSpec((tb, c_out), lambda i: (i, 0)),
        ),
        compiler_params=pltpu.CompilerParams(
            dimension_semantics=("parallel",)),
    )(x, obj_flat, w1, b1, wa, wb, ba, w2, b2)


def _reference(objects, img_feat, params):
    """Unfolded, unpadded reference (matches the PyTorch forward)."""
    obj_flat = objects.reshape(objects.shape[0], -1)
    h = jnp.maximum(img_feat @ params["w_en1"] + params["b_en1"], 0.0)
    h = h @ params["w_en2"] + params["b_en2"]
    cat = jnp.concatenate([h, obj_flat], axis=1)
    c = jnp.maximum(cat @ params["w_cl1"] + params["b_cl1"], 0.0)
    logits = c @ params["w_cl2"] + params["b_cl2"]
    return jax.nn.log_softmax(logits, axis=1)


if __name__ == "__main__":
    # Module hyper-parameters (small, self-consistent)
    c_in, c_obj, n_obj, n_pair, c_extra = 32, 4, 4, 3, 2
    c_img_en = [64, 32]
    c_fusion = [32]
    B = 300  # deliberately NOT a multiple of 8 or of the batch tile (ragged path)

    d_img = c_in + c_obj * n_obj                     # encoder input dim = 48
    d_cat = c_img_en[-1] + c_obj * n_obj             # classifier input dim = 48
    c_out = n_obj * n_pair + c_extra                 # 14

    key = jax.random.PRNGKey(0)
    k = jax.random.split(key, 10)
    params = {
        "w_en1": jax.random.normal(k[0], (d_img, c_img_en[0]), jnp.float32) * 0.1,
        "b_en1": jax.random.normal(k[1], (1, c_img_en[0]), jnp.float32) * 0.01,
        "w_en2": jax.random.normal(k[2], (c_img_en[0], c_img_en[1]), jnp.float32) * 0.1,
        "b_en2": jax.random.normal(k[3], (1, c_img_en[1]), jnp.float32) * 0.01,
        "w_cl1": jax.random.normal(k[4], (d_cat, c_fusion[0]), jnp.float32) * 0.1,
        "b_cl1": jax.random.normal(k[5], (1, c_fusion[0]), jnp.float32) * 0.01,
        "w_cl2": jax.random.normal(k[6], (c_fusion[0], c_out), jnp.float32) * 0.1,
        "b_cl2": jax.random.normal(k[7], (1, c_out), jnp.float32) * 0.01,
    }
    objects = jax.random.normal(k[8], (B, n_obj, c_obj), jnp.float32)
    img_feat = jax.random.normal(k[9], (B, d_img), jnp.float32)

    ref = _reference(objects, img_feat, params)

    # ---- exactness path: f32 streaming, multi-step ragged grid --------------
    folded_f32 = fold_params(params, compute_dtype=jnp.float32)
    out_f32 = jax.block_until_ready(
        joint_transformation_decoder(objects, img_feat, folded_f32, tb=128))
    assert out_f32.shape == (B, c_out)
    assert bool(jnp.all(jnp.isfinite(out_f32))), "non-finite values (f32 path)"
    assert jnp.allclose(out_f32, ref, atol=1e-4, rtol=1e-4), "f32 mismatch vs reference"

    # ---- throughput path: bf16 streaming (default), f32 accumulation --------
    folded_bf16 = fold_params(params, compute_dtype=jnp.bfloat16)
    out_bf16 = jax.block_until_ready(
        joint_transformation_decoder(objects, img_feat, folded_bf16, tb=512))
    assert out_bf16.shape == (B, c_out)
    assert bool(jnp.all(jnp.isfinite(out_bf16))), "non-finite values (bf16 path)"
    assert jnp.allclose(out_bf16, ref, atol=5e-2, rtol=5e-2), "bf16 mismatch vs reference"

    print("KERNEL_OK")
</pallas_src>

<mosaic_0001>
module attributes {stable_mosaic.version = 11 : i64} {
  func.func @_decoder_kernel(%arg0: i32, %arg1: memref<128x48xf32, #tpu.memory_space<vmem>>, %arg2: memref<128x16xf32, #tpu.memory_space<vmem>>, %arg3: memref<48x64xf32, #tpu.memory_space<vmem>>, %arg4: memref<1x64xf32, #tpu.memory_space<vmem>>, %arg5: memref<64x32xf32, #tpu.memory_space<vmem>>, %arg6: memref<16x32xf32, #tpu.memory_space<vmem>>, %arg7: memref<1x32xf32, #tpu.memory_space<vmem>>, %arg8: memref<32x14xf32, #tpu.memory_space<vmem>>, %arg9: memref<1x14xf32, #tpu.memory_space<vmem>>, %arg10: memref<128x14xf32, #tpu.memory_space<vmem>>) attributes {dimension_semantics = [#tpu.dimension_semantics<parallel>], iteration_bounds = array<i64: 3>, scalar_prefetch = 0 : i64, scratch_operands = 0 : i64, tpu.core_type = #tpu.core_type<tc>, window_params = [{transform_indices = @transform_0, window_bounds = array<i64: 128, 48>}, {transform_indices = @transform_1, window_bounds = array<i64: 128, 16>}, {pipeline_mode = #tpu.pipeline_mode<synchronous>, transform_indices = @transform_2, window_bounds = array<i64: 48, 64>}, {pipeline_mode = #tpu.pipeline_mode<synchronous>, transform_indices = @transform_3, window_bounds = array<i64: 1, 64>}, {pipeline_mode = #tpu.pipeline_mode<synchronous>, transform_indices = @transform_4, window_bounds = array<i64: 64, 32>}, {pipeline_mode = #tpu.pipeline_mode<synchronous>, transform_indices = @transform_5, window_bounds = array<i64: 16, 32>}, {pipeline_mode = #tpu.pipeline_mode<synchronous>, transform_indices = @transform_6, window_bounds = array<i64: 1, 32>}, {pipeline_mode = #tpu.pipeline_mode<synchronous>, transform_indices = @transform_7, window_bounds = array<i64: 32, 14>}, {pipeline_mode = #tpu.pipeline_mode<synchronous>, transform_indices = @transform_8, window_bounds = array<i64: 1, 14>}, {transform_indices = @transform_9, window_bounds = array<i64: 128, 14>}]} {
    %c0 = arith.constant 0 : index
    %c0_0 = arith.constant 0 : index
    %0 = vector.load %arg1[%c0, %c0_0] : memref<128x48xf32, #tpu.memory_space<vmem>>, vector<128x48xf32>
    %c0_1 = arith.constant 0 : index
    %c0_2 = arith.constant 0 : index
    %1 = vector.load %arg3[%c0_1, %c0_2] : memref<48x64xf32, #tpu.memory_space<vmem>>, vector<48x64xf32>
    %cst = arith.constant dense<0.000000e+00> : vector<128x64xf32>
    %2 = tpu.matmul %0, %1, %cst {dimension_numbers = #tpu.dot_dimension_numbers<[1], [0], [0], [1], [0, 0, 1, 1], [], []>} : vector<128x48xf32>, vector<48x64xf32>, vector<128x64xf32> -> vector<128x64xf32>
    %c0_3 = arith.constant 0 : index
    %c0_4 = arith.constant 0 : index
    %3 = vector.load %arg4[%c0_3, %c0_4] : memref<1x64xf32, #tpu.memory_space<vmem>>, vector<1x64xf32>
    %4 = vector.broadcast %3 : vector<1x64xf32> to vector<128x64xf32>
    %5 = arith.addf %2, %4 : vector<128x64xf32>
    %cst_5 = arith.constant 0.000000e+00 : f32
    %6 = vector.broadcast %cst_5 : f32 to vector<128x64xf32>
    %7 = arith.maximumf %5, %6 : vector<128x64xf32>
    %c0_6 = arith.constant 0 : index
    %c0_7 = arith.constant 0 : index
    %8 = vector.load %arg5[%c0_6, %c0_7] : memref<64x32xf32, #tpu.memory_space<vmem>>, vector<64x32xf32>
    %cst_8 = arith.constant dense<0.000000e+00> : vector<128x32xf32>
    %9 = tpu.matmul %7, %8, %cst_8 {dimension_numbers = #tpu.dot_dimension_numbers<[1], [0], [0], [1], [0, 0, 1, 1], [], []>} : vector<128x64xf32>, vector<64x32xf32>, vector<128x32xf32> -> vector<128x32xf32>
    %c0_9 = arith.constant 0 : index
    %c0_10 = arith.constant 0 : index
    %10 = vector.load %arg2[%c0_9, %c0_10] : memref<128x16xf32, #tpu.memory_space<vmem>>, vector<128x16xf32>
    %c0_11 = arith.constant 0 : index
    %c0_12 = arith.constant 0 : index
    %11 = vector.load %arg6[%c0_11, %c0_12] : memref<16x32xf32, #tpu.memory_space<vmem>>, vector<16x32xf32>
    %cst_13 = arith.constant dense<0.000000e+00> : vector<128x32xf32>
    %12 = tpu.matmul %10, %11, %cst_13 {dimension_numbers = #tpu.dot_dimension_numbers<[1], [0], [0], [1], [0, 0, 1, 1], [], []>} : vector<128x16xf32>, vector<16x32xf32>, vector<128x32xf32> -> vector<128x32xf32>
    %13 = arith.addf %9, %12 : vector<128x32xf32>
    %c0_14 = arith.constant 0 : index
    %c0_15 = arith.constant 0 : index
    %14 = vector.load %arg7[%c0_14, %c0_15] : memref<1x32xf32, #tpu.memory_space<vmem>>, vector<1x32xf32>
    %15 = vector.broadcast %14 : vector<1x32xf32> to vector<128x32xf32>
    %16 = arith.addf %13, %15 : vector<128x32xf32>
    %cst_16 = arith.constant 0.000000e+00 : f32
    %17 = vector.broadcast %cst_16 : f32 to vector<128x32xf32>
    %18 = arith.maximumf %16, %17 : vector<128x32xf32>
    %c0_17 = arith.constant 0 : index
    %c0_18 = arith.constant 0 : index
    %19 = vector.load %arg8[%c0_17, %c0_18] : memref<32x14xf32, #tpu.memory_space<vmem>>, vector<32x14xf32>
    %cst_19 = arith.constant dense<0.000000e+00> : vector<128x14xf32>
    %20 = tpu.matmul %18, %19, %cst_19 {dimension_numbers = #tpu.dot_dimension_numbers<[1], [0], [0], [1], [0, 0, 1, 1], [], []>} : vector<128x32xf32>, vector<32x14xf32>, vector<128x14xf32> -> vector<128x14xf32>
    %c0_20 = arith.constant 0 : index
    %c0_21 = arith.constant 0 : index
    %21 = vector.load %arg9[%c0_20, %c0_21] : memref<1x14xf32, #tpu.memory_space<vmem>>, vector<1x14xf32>
    %22 = vector.broadcast %21 : vector<1x14xf32> to vector<128x14xf32>
    %23 = arith.addf %20, %22 : vector<128x14xf32>
    %cst_22 = arith.constant dense<0xFF800000> : vector<128xf32>
    %24 = vector.multi_reduction <maximumf>, %23, %cst_22 [1] : vector<128x14xf32> to vector<128xf32>
    %25 = vector.shape_cast %24 : vector<128xf32> to vector<128x1xf32>
    %26 = vector.broadcast %25 : vector<128x1xf32> to vector<128x14xf32>
    %27 = arith.subf %23, %26 : vector<128x14xf32>
    %28 = math.exp %27 : vector<128x14xf32>
    %cst_23 = arith.constant dense<0.000000e+00> : vector<128xf32>
    %29 = vector.multi_reduction <add>, %28, %cst_23 [1] : vector<128x14xf32> to vector<128xf32>
    %30 = vector.shape_cast %29 : vector<128xf32> to vector<128x1xf32>
    %31 = math.log %30 : vector<128x1xf32>
    %32 = vector.broadcast %31 : vector<128x1xf32> to vector<128x14xf32>
    %33 = arith.subf %27, %32 : vector<128x14xf32>
    %c0_24 = arith.constant 0 : index
    %c0_25 = arith.constant 0 : index
    %34 = vector.load %arg10[%c0_24, %c0_25] : memref<128x14xf32, #tpu.memory_space<vmem>>, vector<128x14xf32>
    tpu.vector_store %arg10[%c0_24, %c0_25], %33 {strides = array<i32>} : memref<128x14xf32, #tpu.memory_space<vmem>>, vector<128x14xf32>,
    return
  }
  func.func @transform_0(%arg0: i32) -> (i32, i32) {
    %c0_i32 = arith.constant 0 : i32
    %c0_i32_0 = arith.constant 0 : i32
    return %arg0, %c0_i32 : i32, i32
  }
  func.func @transform_1(%arg0: i32) -> (i32, i32) {
    %c0_i32 = arith.constant 0 : i32
    %c0_i32_0 = arith.constant 0 : i32
    return %arg0, %c0_i32 : i32, i32
  }
  func.func @transform_2(%arg0: i32) -> (i32, i32) {
    %c0_i32 = arith.constant 0 : i32
    %c0_i32_0 = arith.constant 0 : i32
    %c0_i32_1 = arith.constant 0 : i32
    return %c0_i32, %c0_i32_0 : i32, i32
  }
  func.func @transform_3(%arg0: i32) -> (i32, i32) {
    %c0_i32 = arith.constant 0 : i32
    %c0_i32_0 = arith.constant 0 : i32
    %c0_i32_1 = arith.constant 0 : i32
    return %c0_i32, %c0_i32_0 : i32, i32
  }
  func.func @transform_4(%arg0: i32) -> (i32, i32) {
    %c0_i32 = arith.constant 0 : i32
    %c0_i32_0 = arith.constant 0 : i32
    %c0_i32_1 = arith.constant 0 : i32
    return %c0_i32, %c0_i32_0 : i32, i32
  }
  func.func @transform_5(%arg0: i32) -> (i32, i32) {
    %c0_i32 = arith.constant 0 : i32
    %c0_i32_0 = arith.constant 0 : i32
    %c0_i32_1 = arith.constant 0 : i32
    return %c0_i32, %c0_i32_0 : i32, i32
  }
  func.func @transform_6(%arg0: i32) -> (i32, i32) {
    %c0_i32 = arith.constant 0 : i32
    %c0_i32_0 = arith.constant 0 : i32
    %c0_i32_1 = arith.constant 0 : i32
    return %c0_i32, %c0_i32_0 : i32, i32
  }
  func.func @transform_7(%arg0: i32) -> (i32, i32) {
    %c0_i32 = arith.constant 0 : i32
    %c0_i32_0 = arith.constant 0 : i32
    %c0_i32_1 = arith.constant 0 : i32
    return %c0_i32, %c0_i32_0 : i32, i32
  }
  func.func @transform_8(%arg0: i32) -> (i32, i32) {
    %c0_i32 = arith.constant 0 : i32
    %c0_i32_0 = arith.constant 0 : i32
    %c0_i32_1 = arith.constant 0 : i32
    return %c0_i32, %c0_i32_0 : i32, i32
  }
  func.func @transform_9(%arg0: i32) -> (i32, i32) {
    %c0_i32 = arith.constant 0 : i32
    %c0_i32_0 = arith.constant 0 : i32
    return %arg0, %c0_i32 : i32, i32
  }
}

</mosaic_0001>

<llo_original>
// kernel: tpu_custom_call.1
$region0: #{tpu_custom_call.1}
  #allocation0 [shape = 'u32[]', space=smem, size = 0x4, offset = 0x4, fixed_abs, tag = 'smem constant byte address 0x4 - core index']
  #allocation1 [shape = 'u32[144,128]{1,0:T(1,128)}', space=vmem, size = 0x12000, scoped, tag = 'internal scratch']
  %s0 = inlined_call_operand.vmem [shape: f32[300,48], index: 0, kind: input, shape index: {}]
  %s1 = inlined_call_operand.vmem [shape: f32[300,16], index: 1, kind: input, shape index: {}]
  %s2 = inlined_call_operand.vmem [shape: f32[48,64], index: 2, kind: input, shape index: {}]
  %s3 = inlined_call_operand.vmem [shape: f32[1,64], index: 3, kind: input, shape index: {}]
  %s4 = inlined_call_operand.vmem [shape: f32[64,32], index: 4, kind: input, shape index: {}]
  %s5 = inlined_call_operand.vmem [shape: f32[16,32], index: 5, kind: input, shape index: {}]
  %s6 = inlined_call_operand.vmem [shape: f32[1,32], index: 6, kind: input, shape index: {}]
  %s7 = inlined_call_operand.vmem [shape: f32[32,14], index: 7, kind: input, shape index: {}]
  %s8 = inlined_call_operand.vmem [shape: f32[1,14], index: 8, kind: input, shape index: {}]
  %s9 = inlined_call_operand.vmem [shape: f32[300,14], index: 9, kind: output, shape index: {}]
  %s10 = sld [smem:[#allocation0]]
  $region117: #{tpu_custom_call.1} parent=0
    _
  %s12 = ssub.s32 1, %s10
  %s13 = scalar_select 0, %s12, %s10
  $region1: #{tpu_custom_call.1} parent=0
    #allocation2 [shape = 'u8[131072]{0}', space=vmem, size = 0x20000, scoped, tag = 'output window, operand 0']
    loop: start=0, step=1, limit=5
    $region2: #{tpu_custom_call.1} parent=1 // loop_pre_header
      _
    $region3: #{tpu_custom_call.1} parent=1 // loop_header
      %s15 = sphi 0, %s19
      %p16 = scmp.ge.s32.totalorder %s15, 5
      %s25 = sphi 0, %s27
      %s28 = sphi 0, %s25
      %s29 = sphi 0, %s28
      %s45 = sphi 0, %s29
      %s51 = sphi 0, %s53
      %s54 = sphi 0, %s51
      %s55 = sphi 0, %s54
      %s71 = sphi 0, %s55
      %s75 = sphi 0, %s75
      %s77 = sphi 0, %s75
      %s78 = sphi 0, %s77
      %s92 = sphi 0, %s78
      %s96 = sphi 0, %s96
      %s98 = sphi 0, %s96
      %s99 = sphi 0, %s98
      %s113 = sphi 0, %s99
      %s117 = sphi 0, %s117
      %s119 = sphi 0, %s117
      %s120 = sphi 0, %s119
      %s134 = sphi 0, %s120
      %s138 = sphi 0, %s138
      %s140 = sphi 0, %s138
      %s141 = sphi 0, %s140
      %s155 = sphi 0, %s141
      %s159 = sphi 0, %s159
      %s161 = sphi 0, %s159
      %s162 = sphi 0, %s161
      %s176 = sphi 0, %s162
      %s180 = sphi 0, %s180
      %s182 = sphi 0, %s180
      %s183 = sphi 0, %s182
      %s197 = sphi 0, %s183
      %s201 = sphi 0, %s201
      %s203 = sphi 0, %s201
      %s204 = sphi 0, %s203
      %s218 = sphi 0, %s204
      %s224 = sphi 0, %s226
      %s227 = sphi 0, %s224
      %s228 = sphi 0, %s227
      %s244 = sphi 0, %s228
    $region4: #{tpu_custom_call.1} parent=1 // loop_header_branch
      %18 = sbr.rel (%p16) target = $region8
    $region5: #{tpu_custom_call.1} parent=1 // loop_body
      %s20 = ssub.s32 %s15, 1
      %s21 = ssub.s32 %s15, 2
      %s22 = sadd.s32 %s15, 1
      %s23 = ssub.s32 %s15, %s22
      %p24 = scmp.eq.s32.totalorder %s23, 0
      %s26 = sadd.s32 %s25, 1
      %s27 = scalar_select %p24, %s25, %s26
      %p30 = pneg %p24
      %p31 = scmp.eq.s32.totalorder %s15, 2
      %p32 = por %p30, %p31
      %p33 = scmp.ne.s32.totalorder %s25, %s28
      %p34 = scmp.eq.s32.totalorder %s15, 0
      %p35 = por %p33, %p34
      %p36 = scmp.ne.s32.totalorder %s25, %s28
      %p37 = scmp.eq.s32.totalorder %s20, 2
      %p38 = por %p36, %p37
      %p39 = scmp.ne.s32.totalorder %s28, %s29
      %p40 = scmp.eq.s32.totalorder %s20, 0
      %p41 = por %p39, %p40
      %p42 = scmp.ne.s32.totalorder %s28, %s29
      %p43 = scmp.eq.s32.totalorder %s21, 2
      %p44 = por %p42, %p43
      %p46 = scmp.ne.s32.totalorder %s29, %s45
      %p47 = scmp.eq.s32.totalorder %s21, 0
      %p48 = por %p46, %p47
      %s49 = ssub.s32 %s15, %s22
      %p50 = scmp.eq.s32.totalorder %s49, 0
      %s52 = sadd.s32 %s51, 1
      %s53 = scalar_select %p50, %s51, %s52
      %p56 = pneg %p50
      %p57 = scmp.eq.s32.totalorder %s15, 2
      %p58 = por %p56, %p57
      %p59 = scmp.ne.s32.totalorder %s51, %s54
      %p60 = scmp.eq.s32.totalorder %s15, 0
      %p61 = por %p59, %p60
      %p62 = scmp.ne.s32.totalorder %s51, %s54
      %p63 = scmp.eq.s32.totalorder %s20, 2
      %p64 = por %p62, %p63
      %p65 = scmp.ne.s32.totalorder %s54, %s55
      %p66 = scmp.eq.s32.totalorder %s20, 0
      %p67 = por %p65, %p66
      %p68 = scmp.ne.s32.totalorder %s54, %s55
      %p69 = scmp.eq.s32.totalorder %s21, 2
      %p70 = por %p68, %p69
      %p72 = scmp.ne.s32.totalorder %s55, %s71
      %p73 = scmp.eq.s32.totalorder %s21, 0
      %p74 = por %p72, %p73
      %s76 = sadd.s32 %s75, 1
      %p79 = scmp.eq.s32.totalorder %s15, 2
      %p80 = scmp.ne.s32.totalorder %s75, %s77
      %p81 = scmp.eq.s32.totalorder %s15, 0
      %p82 = por %p80, %p81
      %p83 = scmp.ne.s32.totalorder %s75, %s77
      %p84 = scmp.eq.s32.totalorder %s20, 2
      %p85 = por %p83, %p84
      %p86 = scmp.ne.s32.totalorder %s77, %s78
      %p87 = scmp.eq.s32.totalorder %s20, 0
      %p88 = por %p86, %p87
      %p89 = scmp.ne.s32.totalorder %s77, %s78
      %p90 = scmp.eq.s32.totalorder %s21, 2
      %p91 = por %p89, %p90
      %p93 = scmp.ne.s32.totalorder %s78, %s92
      %p94 = scmp.eq.s32.totalorder %s21, 0
      %p95 = por %p93, %p94
      %s97 = sadd.s32 %s96, 1
      %p100 = scmp.eq.s32.totalorder %s15, 2
      %p101 = scmp.ne.s32.totalorder %s96, %s98
      %p102 = scmp.eq.s32.totalorder %s15, 0
      %p103 = por %p101, %p102
      %p104 = scmp.ne.s32.totalorder %s96, %s98
      %p105 = scmp.eq.s32.totalorder %s20, 2
      %p106 = por %p104, %p105
      %p107 = scmp.ne.s32.totalorder %s98, %s99
      %p108 = scmp.eq.s32.totalorder %s20, 0
      %p109 = por %p107, %p108
      %p110 = scmp.ne.s32.totalorder %s98, %s99
      %p111 = scmp.eq.s32.totalorder %s21, 2
      %p112 = por %p110, %p111
      %p114 = scmp.ne.s32.totalorder %s99, %s113
      %p115 = scmp.eq.s32.totalorder %s21, 0
      %p116 = por %p114, %p115
      %s118 = sadd.s32 %s117, 1
      %p121 = scmp.eq.s32.totalorder %s15, 2
      %p122 = scmp.ne.s32.totalorder %s117, %s119
      %p123 = scmp.eq.s32.totalorder %s15, 0
      %p124 = por %p122, %p123
      %p125 = scmp.ne.s32.totalorder %s117, %s119
      %p126 = scmp.eq.s32.totalorder %s20, 2
      %p127 = por %p125, %p126
      %p128 = scmp.ne.s32.totalorder %s119, %s120
      %p129 = scmp.eq.s32.totalorder %s20, 0
      %p130 = por %p128, %p129
      %p131 = scmp.ne.s32.totalorder %s119, %s120
      %p132 = scmp.eq.s32.totalorder %s21, 2
      %p133 = por %p131, %p132
      %p135 = scmp.ne.s32.totalorder %s120, %s134
      %p136 = scmp.eq.s32.totalorder %s21, 0
      %p137 = por %p135, %p136
      %s139 = sadd.s32 %s138, 1
      %p142 = scmp.eq.s32.totalorder %s15, 2
      %p143 = scmp.ne.s32.totalorder %s138, %s140
      %p144 = scmp.eq.s32.totalorder %s15, 0
      %p145 = por %p143, %p144
      %p146 = scmp.ne.s32.totalorder %s138, %s140
      %p147 = scmp.eq.s32.totalorder %s20, 2
      %p148 = por %p146, %p147
      %p149 = scmp.ne.s32.totalorder %s140, %s141
      %p150 = scmp.eq.s32.totalorder %s20, 0
      %p151 = por %p149, %p150
      %p152 = scmp.ne.s32.totalorder %s140, %s141
      %p153 = scmp.eq.s32.totalorder %s21, 2
      %p154 = por %p152, %p153
      %p156 = scmp.ne.s32.totalorder %s141, %s155
      %p157 = scmp.eq.s32.totalorder %s21, 0
      %p158 = por %p156, %p157
      %s160 = sadd.s32 %s159, 1
      %p163 = scmp.eq.s32.totalorder %s15, 2
      %p164 = scmp.ne.s32.totalorder %s159, %s161
      %p165 = scmp.eq.s32.totalorder %s15, 0
      %p166 = por %p164, %p165
      %p167 = scmp.ne.s32.totalorder %s159, %s161
      %p168 = scmp.eq.s32.totalorder %s20, 2
      %p169 = por %p167, %p168
      %p170 = scmp.ne.s32.totalorder %s161, %s162
      %p171 = scmp.eq.s32.totalorder %s20, 0
      %p172 = por %p170, %p171
      %p173 = scmp.ne.s32.totalorder %s161, %s162
      %p174 = scmp.eq.s32.totalorder %s21, 2
      %p175 = por %p173, %p174
      %p177 = scmp.ne.s32.totalorder %s162, %s176
      %p178 = scmp.eq.s32.totalorder %s21, 0
      %p179 = por %p177, %p178
      %s181 = sadd.s32 %s180, 1
      %p184 = scmp.eq.s32.totalorder %s15, 2
      %p185 = scmp.ne.s32.totalorder %s180, %s182
      %p186 = scmp.eq.s32.totalorder %s15, 0
      %p187 = por %p185, %p186
      %p188 = scmp.ne.s32.totalorder %s180, %s182
      %p189 = scmp.eq.s32.totalorder %s20, 2
      %p190 = por %p188, %p189
      %p191 = scmp.ne.s32.totalorder %s182, %s183
      %p192 = scmp.eq.s32.totalorder %s20, 0
      %p193 = por %p191, %p192
      %p194 = scmp.ne.s32.totalorder %s182, %s183
      %p195 = scmp.eq.s32.totalorder %s21, 2
      %p196 = por %p194, %p195
      %p198 = scmp.ne.s32.totalorder %s183, %s197
      %p199 = scmp.eq.s32.totalorder %s21, 0
      %p200 = por %p198, %p199
      %s202 = sadd.s32 %s201, 1
      %p205 = scmp.eq.s32.totalorder %s15, 2
      %p206 = scmp.ne.s32.totalorder %s201, %s203
      %p207 = scmp.eq.s32.totalorder %s15, 0
      %p208 = por %p206, %p207
      %p209 = scmp.ne.s32.totalorder %s201, %s203
      %p210 = scmp.eq.s32.totalorder %s20, 2
      %p211 = por %p209, %p210
      %p212 = scmp.ne.s32.totalorder %s203, %s204
      %p213 = scmp.eq.s32.totalorder %s20, 0
      %p214 = por %p212, %p213
      %p215 = scmp.ne.s32.totalorder %s203, %s204
      %p216 = scmp.eq.s32.totalorder %s21, 2
      %p217 = por %p215, %p216
      %p219 = scmp.ne.s32.totalorder %s204, %s218
      %p220 = scmp.eq.s32.totalorder %s21, 0
      %p221 = por %p219, %p220
      %s222 = ssub.s32 %s15, %s22
      %p223 = scmp.eq.s32.totalorder %s222, 0
      %s225 = sadd.s32 %s224, 1
      %s226 = scalar_select %p223, %s224, %s225
      %p229 = pneg %p223
      %p230 = scmp.eq.s32.totalorder %s15, 2
      %p231 = por %p229, %p230
      %p232 = scmp.ne.s32.totalorder %s224, %s227
      %p233 = scmp.eq.s32.totalorder %s15, 0
      %p234 = por %p232, %p233
      %p235 = scmp.ne.s32.totalorder %s224, %s227
      %p236 = scmp.eq.s32.totalorder %s20, 2
      %p237 = por %p235, %p236
      %p238 = scmp.ne.s32.totalorder %s227, %s228
      %p239 = scmp.eq.s32.totalorder %s20, 0
      %p240 = por %p238, %p239
      %p241 = scmp.ne.s32.totalorder %s227, %s228
      %p242 = scmp.eq.s32.totalorder %s21, 2
      %p243 = por %p241, %p242
      %p245 = scmp.ne.s32.totalorder %s228, %s244
      %p246 = scmp.eq.s32.totalorder %s21, 0
      %p247 = por %p245, %p246
      %p248 = scmp.le.s32.totalorder 1, %s15
      %p249 = scmp.lt.s32.totalorder %s15, 4
      %p250 = pnand %p248, %p249
      %p251 = pneg %p250
      // Predicated region
      $region9: #{tpu_custom_call.1} parent=5 // pred_check
        _
      $region10: #{tpu_custom_call.1} parent=5 // pred_check_branch
        %253 = sbr.rel (%p250) target = $region12
      $region11: #{tpu_custom_call.1} parent=5 // pred_region
        %s254 = ssub.s32 %s15, 1
        // Predicated region
        $region13: #{tpu_custom_call.1} parent=11 // pred_check
          %p255 = pneg %p88
        $region14: #{tpu_custom_call.1} parent=11 // pred_check_branch
          %257 = sbr.rel (%p255) target = $region16
        $region15: #{tpu_custom_call.1} parent=11 // pred_region
          _
        $region16: #{tpu_custom_call.1} parent=11 // pred_fallthru
          _
        // Predicated region
        $region17: #{tpu_custom_call.1} parent=11 // pred_check
          %p258 = pneg %p109
        $region18: #{tpu_custom_call.1} parent=11 // pred_check_branch
          %260 = sbr.rel (%p258) target = $region20
        $region19: #{tpu_custom_call.1} parent=11 // pred_region
          _
        $region20: #{tpu_custom_call.1} parent=11 // pred_fallthru
          _
        // Predicated region
        $region21: #{tpu_custom_call.1} parent=11 // pred_check
          %p261 = pneg %p130
        $region22: #{tpu_custom_call.1} parent=11 // pred_check_branch
          %263 = sbr.rel (%p261) target = $region24
        $region23: #{tpu_custom_call.1} parent=11 // pred_region
          _
        $region24: #{tpu_custom_call.1} parent=11 // pred_fallthru
          _
        // Predicated region
        $region25: #{tpu_custom_call.1} parent=11 // pred_check
          %p264 = pneg %p151
        $region26: #{tpu_custom_call.1} parent=11 // pred_check_branch
          %266 = sbr.rel (%p264) target = $region28
        $region27: #{tpu_custom_call.1} parent=11 // pred_region
          _
        $region28: #{tpu_custom_call.1} parent=11 // pred_fallthru
          _
        // Predicated region
        $region29: #{tpu_custom_call.1} parent=11 // pred_check
          %p267 = pneg %p172
        $region30: #{tpu_custom_call.1} parent=11 // pred_check_branch
          %269 = sbr.rel (%p267) target = $region32
        $region31: #{tpu_custom_call.1} parent=11 // pred_region
          _
        $region32: #{tpu_custom_call.1} parent=11 // pred_fallthru
          _
        // Predicated region
        $region33: #{tpu_custom_call.1} parent=11 // pred_check
          %p270 = pneg %p193
        $region34: #{tpu_custom_call.1} parent=11 // pred_check_branch
          %272 = sbr.rel (%p270) target = $region36
        $region35: #{tpu_custom_call.1} parent=11 // pred_region
          _
        $region36: #{tpu_custom_call.1} parent=11 // pred_fallthru
          _
        // Predicated region
        $region37: #{tpu_custom_call.1} parent=11 // pred_check
          %p273 = pneg %p214
        $region38: #{tpu_custom_call.1} parent=11 // pred_check_branch
          %275 = sbr.rel (%p273) target = $region40
        $region39: #{tpu_custom_call.1} parent=11 // pred_region
          _
        $region40: #{tpu_custom_call.1} parent=11 // pred_fallthru
          _
      $region12: #{tpu_custom_call.1} parent=5 // pred_fallthru
        _
      %p276 = scmp.lt.s32.totalorder %s15, 3
      // Predicated region
      $region41: #{tpu_custom_call.1} parent=5 // pred_check
        %p277 = pneg %p276
      $region42: #{tpu_custom_call.1} parent=5 // pred_check_branch
        %279 = sbr.rel (%p277) target = $region44
      $region43: #{tpu_custom_call.1} parent=5 // pred_region
        // Predicated region
        $region45: #{tpu_custom_call.1} parent=43 // pred_check
          %p280 = pneg %p35
        $region46: #{tpu_custom_call.1} parent=43 // pred_check_branch
          %282 = sbr.rel (%p280) target = $region48
        $region47: #{tpu_custom_call.1} parent=43 // pred_region
          %s283 = smul.u32 16, %s15
          %s284 = ssub.s32 38, %s283
          %p285 = scmp.lt.s32.totalorder %s284, 16
          %s286 = scalar_select %p285, %s284, 16
          %s287 = smul.u32 128, %s286
          %p288 = scmp.lt.s32.totalorder %s283, 37
          %s289 = scalar_select %p288, %s283, 37
          %s290 = smul.addr %s289, 8
          %s291 = scalar_lea.vmem %s0, %s290
          %s292 = smul.u32 16, %s15
          %s293 = ssub.s32 38, %s292
          %p294 = scmp.lt.s32.totalorder %s293, 16
          %s295 = scalar_select %p294, %s293, 16
          %s296 = smul.u32 128, %s295
        $region48: #{tpu_custom_call.1} parent=43 // pred_fallthru
          _
        // Predicated region
        $region49: #{tpu_custom_call.1} parent=43 // pred_check
          %p297 = pneg %p61
        $region50: #{tpu_custom_call.1} parent=43 // pred_check_branch
          %299 = sbr.rel (%p297) target = $region52
        $region51: #{tpu_custom_call.1} parent=43 // pred_region
          %s300 = smul.u32 16, %s15
          %s301 = ssub.s32 38, %s300
          %p302 = scmp.lt.s32.totalorder %s301, 16
          %s303 = scalar_select %p302, %s301, 16
          %s304 = smul.u32 128, %s303
          %p305 = scmp.lt.s32.totalorder %s300, 37
          %s306 = scalar_select %p305, %s300, 37
          %s307 = smul.addr %s306, 8
          %s308 = scalar_lea.vmem %s1, %s307
          %s309 = smul.u32 16, %s15
          %s310 = ssub.s32 38, %s309
          %p311 = scmp.lt.s32.totalorder %s310, 16
          %s312 = scalar_select %p311, %s310, 16
          %s313 = smul.u32 128, %s312
        $region52: #{tpu_custom_call.1} parent=43 // pred_fallthru
          _
      $region44: #{tpu_custom_call.1} parent=5 // pred_fallthru
        _
      %p314 = scmp.le.s32.totalorder 1, %s15
      %p315 = scmp.lt.s32.totalorder %s15, 4
      %p316 = pnand %p314, %p315
      %p317 = pneg %p316
      // Predicated region
      $region53: #{tpu_custom_call.1} parent=5 // pred_check
        _
      $region54: #{tpu_custom_call.1} parent=5 // pred_check_branch
        %319 = sbr.rel (%p316) target = $region56
      $region55: #{tpu_custom_call.1} parent=5 // pred_region
        %s320 = ssub.s32 %s15, 1
        %s321 = smul.u32 16, %s20
        %s322 = ssub.s32 38, %s321
        %p323 = scmp.lt.s32.totalorder %s322, 16
        %s324 = scalar_select %p323, %s322, 16
        %s325 = smul.u32 128, %s324
        %p326 = scmp.lt.s32.totalorder %s321, 37
        %s327 = scalar_select %p326, %s321, 37
        %s328 = smul.addr %s327, 8
        %s329 = scalar_lea.vmem %s0, %s328
        %p330 = pneg %p41
        %p331 = pneg %p38
        %s332 = smul.u32 16, %s20
        %s333 = ssub.s32 38, %s332
        %p334 = scmp.lt.s32.totalorder %s333, 16
        %s335 = scalar_select %p334, %s333, 16
        %s336 = smul.u32 128, %s335
        %p337 = scmp.lt.s32.totalorder %s332, 37
        %s338 = scalar_select %p337, %s332, 37
        %s339 = smul.addr %s338, 8
        %s340 = scalar_lea.vmem %s1, %s339
        %p341 = pneg %p67
        %p342 = pneg %p64
        %p343 = pneg %p88
        %p344 = pneg %p85
        %p345 = pneg %p109
        %p346 = pneg %p106
        %p347 = pneg %p130
        %p348 = pneg %p127
        %p349 = pneg %p151
        %p350 = pneg %p148
        %p351 = pneg %p172
        %p352 = pneg %p169
        %p353 = pneg %p193
        %p354 = pneg %p190
        %p355 = pneg %p214
        %p356 = pneg %p211
        %p357 = pneg %p240
        %p358 = pneg %p237
        %s359 = sand.u32 %s227, 1
        %s360 = sand.u32 %s227, 1
        %s361 = smul.addr %s360, 128
        %s362 = scalar_lea.vmem [#allocation2], %s361
        %s363 = smul.u32 16, %s20
        %s364 = ssub.s32 38, %s363
        %p365 = scmp.lt.s32.totalorder %s364, 16
        %s366 = scalar_select %p365, %s364, 16
        %s367 = smul.u32 128, %s366
        %p368 = scmp.lt.s32.totalorder %s363, 37
        %s369 = scalar_select %p368, %s363, 37
        %s370 = smul.addr %s369, 8
        %s371 = scalar_lea.vmem %s0, %s370
        %s372 = smul.u32 16, %s20
        %s373 = ssub.s32 38, %s372
        %p374 = scmp.lt.s32.totalorder %s373, 16
        %s375 = scalar_select %p374, %s373, 16
        %s376 = smul.u32 128, %s375
        %s377 = smul.u32 16, %s20
        %s378 = ssub.s32 38, %s377
        %p379 = scmp.lt.s32.totalorder %s378, 16
        %s380 = scalar_select %p379, %s378, 16
        %s381 = smul.u32 128, %s380
        %p382 = scmp.lt.s32.totalorder %s377, 37
        %s383 = scalar_select %p382, %s377, 37
        %s384 = smul.addr %s383, 8
        %s385 = scalar_lea.vmem %s1, %s384
        %s386 = smul.u32 16, %s20
        %s387 = ssub.s32 38, %s386
        %p388 = scmp.lt.s32.totalorder %s387, 16
        %s389 = scalar_select %p388, %s387, 16
        %s390 = smul.u32 128, %s389
        %s391 = smul.u32 16, %s20
        %s392 = ssub.s32 38, %s391
        %p393 = scmp.lt.s32.totalorder %s392, 16
        %s394 = scalar_select %p393, %s392, 16
        %s395 = smul.u32 128, %s394
        %v396 = vld [vmem:[%s371] sm:$0xff]
        %v397 = vld [vmem:[%s371 + $0x8] sm:$0xff]
        %v398 = vld [vmem:[%s371 + $0x10] sm:$0xff]
        %v399 = vld [vmem:[%s371 + $0x18] sm:$0xff]
        %v400 = vld [vmem:[%s371 + $0x20] sm:$0xff]
        %v401 = vld [vmem:[%s371 + $0x28] sm:$0xff]
        %v402 = vld [vmem:[%s371 + $0x30] sm:$0xff]
        %v403 = vld [vmem:[%s371 + $0x38] sm:$0xff]
        %v404 = vld [vmem:[%s371 + $0x40] sm:$0xff]
        %v405 = vld [vmem:[%s371 + $0x48] sm:$0xff]
        %v406 = vld [vmem:[%s371 + $0x50] sm:$0xff]
        %v407 = vld [vmem:[%s371 + $0x58] sm:$0xff]
        %v408 = vld [vmem:[%s371 + $0x60] sm:$0xff]
        %v409 = vld [vmem:[%s371 + $0x68] sm:$0xff]
        %v410 = vld [vmem:[%s371 + $0x70] sm:$0xff]
        %v411 = vld [vmem:[%s371 + $0x78] sm:$0xff]
        %v412 = vld [vmem:[%s2] sm:$0xff]
        %v413 = vld [vmem:[%s2 + $0x8] sm:$0xff]
        %v414 = vld [vmem:[%s2 + $0x10] sm:$0xff]
        %v415 = vld [vmem:[%s2 + $0x18] sm:$0xff]
        %v416 = vld [vmem:[%s2 + $0x20] sm:$0xff]
        %v417 = vld [vmem:[%s2 + $0x28] sm:$0xff]
        %v418 = vld [vmem:[%s3] sm:$0x1]
        %v420 = vlaneseq
        %v421 = vshrl.u32 %v420, 7
        %v422 = vsub.s32 0, %v421
        %v423 = vrot.slane %v418, %v422
        %vm425 = vcmask 392192
        %v427 = vsel %vm425, %v396, 0
        %v430 = vsel %vm425, %v397, 0
        %v433 = vsel %vm425, %v398, 0
        %v436 = vsel %vm425, %v399, 0
        %v439 = vsel %vm425, %v400, 0
        %v442 = vsel %vm425, %v401, 0
        %v445 = vsel %vm425, %v402, 0
        %v448 = vsel %vm425, %v403, 0
        %v451 = vsel %vm425, %v404, 0
        %v454 = vsel %vm425, %v405, 0
        %v457 = vsel %vm425, %v406, 0
        %v460 = vsel %vm425, %v407, 0
        %v463 = vsel %vm425, %v408, 0
        %v466 = vsel %vm425, %v409, 0
        %v469 = vsel %vm425, %v410, 0
        %v472 = vsel %vm425, %v411, 0
        %474 = vmatprep.subr.mxu0 0.0
        %475 = vmatpush1.msra.mxu0 %v412
        %476 = vmatprep.subr.mxu0 0.0
        %477 = vmatpush1.msra.mxu0 %v413
        %478 = vmatprep.subr.mxu0 0.0
        %479 = vmatpush1.msra.mxu0 %v414
        %480 = vmatprep.subr.mxu0 0.0
        %481 = vmatpush1.msra.mxu0 %v415
        %482 = vmatprep.subr.mxu0 0.0
        %483 = vmatpush1.msra.mxu0 %v416
        %484 = vmatprep.subr.mxu0 0.0
        %485 = vmatpush1.msra.mxu0 %v417
        %486 = vmatprep.subr.mxu0 0.0
        %487 = vmatpush1.msra.mxu0 0.0
        %488 = vmatprep.subr.mxu0 0.0
        %489 = vmatpush1.msra.mxu0 0.0
        %490 = vmatprep.subr.mxu0 0.0
        %491 = vmatpush1.msra.mxu0 0.0
        %492 = vmatprep.subr.mxu0 0.0
        %493 = vmatpush1.msra.mxu0 0.0
        %494 = vmatprep.subr.mxu0 0.0
        %495 = vmatpush1.msra.mxu0 0.0
        %496 = vmatprep.subr.mxu0 0.0
        %497 = vmatpush1.msra.mxu0 0.0
        %498 = vmatprep.subr.mxu0 0.0
        %499 = vmatpush1.msra.mxu0 0.0
        %500 = vmatprep.subr.mxu0 0.0
        %501 = vmatpush1.msra.mxu0 0.0
        %502 = vmatprep.subr.mxu0 0.0
        %503 = vmatpush1.msra.mxu0 0.0
        %504 = vmatprep.subr.mxu0 0.0
        %505 = vmatpush1.msra.mxu0 0.0
        %506 = vmatprep.subr.mxu0 0.0
        %507 = vmatpush1.msra.mxu0 0.0
        %508 = vmatprep.subr.mxu0 0.0
        %509 = vmatpush1.msra.mxu0 0.0
        %510 = vmatprep.subr.mxu0 0.0
        %511 = vmatpush1.msra.mxu0 0.0
        %512 = vmatprep.subr.mxu0 0.0
        %513 = vmatpush1.msra.mxu0 0.0
        %514 = vmatprep.subr.mxu0 0.0
        %515 = vmatpush1.msra.mxu0 0.0
        %516 = vmatprep.subr.mxu0 0.0
        %517 = vmatpush1.msra.mxu0 0.0
        %518 = vmatprep.subr.mxu0 0.0
        %519 = vmatpush1.msra.mxu0 0.0
        %520 = vmatprep.subr.mxu0 0.0
        %521 = vmatpush1.msra.mxu0 0.0
        %522 = vmatprep.subr.mxu0 0.0
        %523 = vmatpush1.msra.mxu0 0.0
        %524 = vmatprep.subr.mxu0 0.0
        %525 = vmatpush1.msra.mxu0 0.0
        %526 = vmatprep.subr.mxu0 0.0
        %527 = vmatpush1.msra.mxu0 0.0
        %528 = vmatprep.subr.mxu0 0.0
        %529 = vmatpush1.msra.mxu0 0.0
        %530 = vmatprep.subr.mxu0 0.0
        %531 = vmatpush1.msra.mxu0 0.0
        %532 = vmatprep.subr.mxu0 0.0
        %533 = vmatpush1.msra.mxu0 0.0
        %534 = vmatprep.subr.mxu0 0.0
        %535 = vmatpush1.msra.mxu0 0.0
        %536 = vmatprep.subr.mxu0 0.0
        %537 = vmatpush1.msra.mxu0 0.0
        %538 = vmatprep.mubr.f32.mxu0 0.0
        %539 = vmatmul.mubr.f32.gmra.mrb[0].mxu0 %v427
        %v540 = vpop.f32.mrb[0].mxu0
        %v541 = vadd.f32 %v423, %v540
        %v542 = vpop.f32.mrb[0].mxu0
        %543 = vmatprep.mubr.f32.mxu0 0.0
        %544 = vmatmul.mubr.f32.gmra.mrb[0].mxu0 %v430
        %v545 = vpop.f32.mrb[0].mxu0
        %v546 = vadd.f32 %v423, %v545
        %v547 = vpop.f32.mrb[0].mxu0
        %548 = vmatprep.mubr.f32.mxu0 0.0
        %549 = vmatmul.mubr.f32.gmra.mrb[0].mxu0 %v433
        %v550 = vpop.f32.mrb[0].mxu0
        %v551 = vadd.f32 %v423, %v550
        %v552 = vpop.f32.mrb[0].mxu0
        %553 = vmatprep.mubr.f32.mxu0 0.0
        %554 = vmatmul.mubr.f32.gmra.mrb[0].mxu0 %v436
        %v555 = vpop.f32.mrb[0].mxu0
        %v556 = vadd.f32 %v423, %v555
        %v557 = vpop.f32.mrb[0].mxu0
        %558 = vmatprep.mubr.f32.mxu0 0.0
        %559 = vmatmul.mubr.f32.gmra.mrb[0].mxu0 %v439
        %v560 = vpop.f32.mrb[0].mxu0
        %v561 = vadd.f32 %v423, %v560
        %v562 = vpop.f32.mrb[0].mxu0
        %563 = vmatprep.mubr.f32.mxu0 0.0
        %564 = vmatmul.mubr.f32.gmra.mrb[0].mxu0 %v442
        %v565 = vpop.f32.mrb[0].mxu0
        %v566 = vadd.f32 %v423, %v565
        %v567 = vpop.f32.mrb[0].mxu0
        %568 = vmatprep.mubr.f32.mxu0 0.0
        %569 = vmatmul.mubr.f32.gmra.mrb[0].mxu0 %v445
        %v570 = vpop.f32.mrb[0].mxu0
        %v571 = vadd.f32 %v423, %v570
        %v572 = vpop.f32.mrb[0].mxu0
        %573 = vmatprep.mubr.f32.mxu0 0.0
        %574 = vmatmul.mubr.f32.gmra.mrb[0].mxu0 %v448
        %v575 = vpop.f32.mrb[0].mxu0
        %v576 = vadd.f32 %v423, %v575
        %v577 = vpop.f32.mrb[0].mxu0
        %578 = vmatprep.mubr.f32.mxu0 0.0
        %579 = vmatmul.mubr.f32.gmra.mrb[0].mxu0 %v451
        %v580 = vpop.f32.mrb[0].mxu0
        %v581 = vadd.f32 %v423, %v580
        %v582 = vpop.f32.mrb[0].mxu0
        %583 = vmatprep.mubr.f32.mxu0 0.0
        %584 = vmatmul.mubr.f32.gmra.mrb[0].mxu0 %v454
        %v585 = vpop.f32.mrb[0].mxu0
        %v586 = vadd.f32 %v423, %v585
        %v587 = vpop.f32.mrb[0].mxu0
        %588 = vmatprep.mubr.f32.mxu0 0.0
        %589 = vmatmul.mubr.f32.gmra.mrb[0].mxu0 %v457
        %v590 = vpop.f32.mrb[0].mxu0
        %v591 = vadd.f32 %v423, %v590
        %v592 = vpop.f32.mrb[0].mxu0
        %593 = vmatprep.mubr.f32.mxu0 0.0
        %594 = vmatmul.mubr.f32.gmra.mrb[0].mxu0 %v460
        %v595 = vpop.f32.mrb[0].mxu0
        %v596 = vadd.f32 %v423, %v595
        %v597 = vpop.f32.mrb[0].mxu0
        %598 = vmatprep.mubr.f32.mxu0 0.0
        %599 = vmatmul.mubr.f32.gmra.mrb[0].mxu0 %v463
        %v600 = vpop.f32.mrb[0].mxu0
        %v601 = vadd.f32 %v423, %v600
        %v602 = vpop.f32.mrb[0].mxu0
        %603 = vmatprep.mubr.f32.mxu0 0.0
        %604 = vmatmul.mubr.f32.gmra.mrb[0].mxu0 %v466
        %v605 = vpop.f32.mrb[0].mxu0
        %v606 = vadd.f32 %v423, %v605
        %v607 = vpop.f32.mrb[0].mxu0
        %608 = vmatprep.mubr.f32.mxu0 0.0
        %609 = vmatmul.mubr.f32.gmra.mrb[0].mxu0 %v469
        %v610 = vpop.f32.mrb[0].mxu0
        %v611 = vadd.f32 %v423, %v610
        %v612 = vpop.f32.mrb[0].mxu0
        %613 = vmatprep.mubr.f32.mxu0 0.0
        %614 = vmatmul.mubr.f32.gmra.mrb[0].mxu0 %v472
        %v615 = vpop.f32.mrb[0].mxu0
        %v616 = vadd.f32 %v423, %v615
        %v617 = vpop.f32.mrb[0].mxu0
        %618 = vdwg.mxu0
        %v619 = vmax.f32 %v541, 0.0
        %v620 = vmax.f32 %v546, 0.0
        %v621 = vmax.f32 %v551, 0.0
        %v622 = vmax.f32 %v556, 0.0
        %v623 = vmax.f32 %v561, 0.0
        %v624 = vmax.f32 %v566, 0.0
        %v625 = vmax.f32 %v571, 0.0
        %v626 = vmax.f32 %v576, 0.0
        %v627 = vmax.f32 %v581, 0.0
        %v628 = vmax.f32 %v586, 0.0
        %v629 = vmax.f32 %v591, 0.0
        %v630 = vmax.f32 %v596, 0.0
        %v631 = vmax.f32 %v601, 0.0
        %v632 = vmax.f32 %v606, 0.0
        %v633 = vmax.f32 %v611, 0.0
        %v634 = vmax.f32 %v616, 0.0
        %v635 = vld [vmem:[%s4] sm:$0xff]
        %v636 = vld [vmem:[%s4 + $0x8] sm:$0xff]
        %v637 = vld [vmem:[%s4 + $0x10] sm:$0xff]
        %v638 = vld [vmem:[%s4 + $0x18] sm:$0xff]
        %v639 = vld [vmem:[%s4 + $0x20] sm:$0xff]
        %v640 = vld [vmem:[%s4 + $0x28] sm:$0xff]
        %v641 = vld [vmem:[%s4 + $0x30] sm:$0xff]
        %v642 = vld [vmem:[%s4 + $0x38] sm:$0xff]
        %v643 = vld [vmem:[%s385] sm:$0xff]
        %v644 = vld [vmem:[%s385 + $0x8] sm:$0xff]
        %v645 = vld [vmem:[%s385 + $0x10] sm:$0xff]
        %v646 = vld [vmem:[%s385 + $0x18] sm:$0xff]
        %v647 = vld [vmem:[%s385 + $0x20] sm:$0xff]
        %v648 = vld [vmem:[%s385 + $0x28] sm:$0xff]
        %v649 = vld [vmem:[%s385 + $0x30] sm:$0xff]
        %v650 = vld [vmem:[%s385 + $0x38] sm:$0xff]
        %v651 = vld [vmem:[%s385 + $0x40] sm:$0xff]
        %v652 = vld [vmem:[%s385 + $0x48] sm:$0xff]
        %v653 = vld [vmem:[%s385 + $0x50] sm:$0xff]
        %v654 = vld [vmem:[%s385 + $0x58] sm:$0xff]
        %v655 = vld [vmem:[%s385 + $0x60] sm:$0xff]
        %v656 = vld [vmem:[%s385 + $0x68] sm:$0xff]
        %v657 = vld [vmem:[%s385 + $0x70] sm:$0xff]
        %v658 = vld [vmem:[%s385 + $0x78] sm:$0xff]
        %v659 = vld [vmem:[%s5] sm:$0xff]
        %v660 = vld [vmem:[%s5 + $0x8] sm:$0xff]
        %vm661 = vcmask 130048
        %v663 = vsel %vm661, %v643, 0
        %v666 = vsel %vm661, %v644, 0
        %v669 = vsel %vm661, %v645, 0
        %v672 = vsel %vm661, %v646, 0
        %v675 = vsel %vm661, %v647, 0
        %v678 = vsel %vm661, %v648, 0
        %v681 = vsel %vm661, %v649, 0
        %v684 = vsel %vm661, %v650, 0
        %v687 = vsel %vm661, %v651, 0
        %v690 = vsel %vm661, %v652, 0
        %v693 = vsel %vm661, %v653, 0
        %v696 = vsel %vm661, %v654, 0
        %v699 = vsel %vm661, %v655, 0
        %v702 = vsel %vm661, %v656, 0
        %v705 = vsel %vm661, %v657, 0
        %v708 = vsel %vm661, %v658, 0
        %710 = vmatprep.subr.mxu0 0.0
        %711 = vmatpush1.msra.mxu0 %v659
        %712 = vmatprep.subr.mxu0 0.0
        %713 = vmatpush1.msra.mxu0 %v660
        %714 = vmatprep.subr.mxu0 0.0
        %715 = vmatpush1.msra.mxu0 0.0
        %716 = vmatprep.subr.mxu0 0.0
        %717 = vmatpush1.msra.mxu0 0.0
        %718 = vmatprep.subr.mxu0 0.0
        %719 = vmatpush1.msra.mxu0 0.0
        %720 = vmatprep.subr.mxu0 0.0
        %721 = vmatpush1.msra.mxu0 0.0
        %722 = vmatprep.subr.mxu0 0.0
        %723 = vmatpush1.msra.mxu0 0.0
        %724 = vmatprep.subr.mxu0 0.0
        %725 = vmatpush1.msra.mxu0 0.0
        %726 = vmatprep.subr.mxu0 0.0
        %727 = vmatpush1.msra.mxu0 0.0
        %728 = vmatprep.subr.mxu0 0.0
        %729 = vmatpush1.msra.mxu0 0.0
        %730 = vmatprep.subr.mxu0 0.0
        %731 = vmatpush1.msra.mxu0 0.0
        %732 = vmatprep.subr.mxu0 0.0
        %733 = vmatpush1.msra.mxu0 0.0
        %734 = vmatprep.subr.mxu0 0.0
        %735 = vmatpush1.msra.mxu0 0.0
        %736 = vmatprep.subr.mxu0 0.0
        %737 = vmatpush1.msra.mxu0 0.0
        %738 = vmatprep.subr.mxu0 0.0
        %739 = vmatpush1.msra.mxu0 0.0
        %740 = vmatprep.subr.mxu0 0.0
        %741 = vmatpush1.msra.mxu0 0.0
        %742 = vmatprep.subr.mxu0 0.0
        %743 = vmatpush1.msra.mxu0 0.0
        %744 = vmatprep.subr.mxu0 0.0
        %745 = vmatpush1.msra.mxu0 0.0
        %746 = vmatprep.subr.mxu0 0.0
        %747 = vmatpush1.msra.mxu0 0.0
        %748 = vmatprep.subr.mxu0 0.0
        %749 = vmatpush1.msra.mxu0 0.0
        %750 = vmatprep.subr.mxu0 0.0
        %751 = vmatpush1.msra.mxu0 0.0
        %752 = vmatprep.subr.mxu0 0.0
        %753 = vmatpush1.msra.mxu0 0.0
        %754 = vmatprep.subr.mxu0 0.0
        %755 = vmatpush1.msra.mxu0 0.0
        %756 = vmatprep.subr.mxu0 0.0
        %757 = vmatpush1.msra.mxu0 0.0
        %758 = vmatprep.subr.mxu0 0.0
        %759 = vmatpush1.msra.mxu0 0.0
        %760 = vmatprep.subr.mxu0 0.0
        %761 = vmatpush1.msra.mxu0 0.0
        %762 = vmatprep.subr.mxu0 0.0
        %763 = vmatpush1.msra.mxu0 0.0
        %764 = vmatprep.subr.mxu0 0.0
        %765 = vmatpush1.msra.mxu0 0.0
        %766 = vmatprep.subr.mxu0 0.0
        %767 = vmatpush1.msra.mxu0 0.0
        %768 = vmatprep.subr.mxu0 0.0
        %769 = vmatpush1.msra.mxu0 0.0
        %770 = vmatprep.subr.mxu0 0.0
        %771 = vmatpush1.msra.mxu0 0.0
        %772 = vmatprep.subr.mxu0 0.0
        %773 = vmatpush1.msra.mxu0 0.0
        %774 = vmatprep.mubr.f32.mxu0 0.0
        %775 = vmatmul.mubr.f32.gmra.mrb[0].mxu0 %v663
        %v776 = vpop.f32.mrb[0].mxu0
        %v777 = vadd.f32 0.0, %v776
        %v778 = vpop.f32.mrb[0].mxu0
        %779 = vmatprep.mubr.f32.mxu0 0.0
        %780 = vmatmul.mubr.f32.gmra.mrb[0].mxu0 %v666
        %v781 = vpop.f32.mrb[0].mxu0
        %v782 = vadd.f32 0.0, %v781
        %v783 = vpop.f32.mrb[0].mxu0
        %784 = vmatprep.mubr.f32.mxu0 0.0
        %785 = vmatmul.mubr.f32.gmra.mrb[0].mxu0 %v669
        %v786 = vpop.f32.mrb[0].mxu0
        %v787 = vadd.f32 0.0, %v786
        %v788 = vpop.f32.mrb[0].mxu0
        %789 = vmatprep.mubr.f32.mxu0 0.0
        %790 = vmatmul.mubr.f32.gmra.mrb[0].mxu0 %v672
        %v791 = vpop.f32.mrb[0].mxu0
        %v792 = vadd.f32 0.0, %v791
        %v793 = vpop.f32.mrb[0].mxu0
        %794 = vmatprep.mubr.f32.mxu0 0.0
        %795 = vmatmul.mubr.f32.gmra.mrb[0].mxu0 %v675
        %v796 = vpop.f32.mrb[0].mxu0
        %v797 = vadd.f32 0.0, %v796
        %v798 = vpop.f32.mrb[0].mxu0
        %799 = vmatprep.mubr.f32.mxu0 0.0
        %800 = vmatmul.mubr.f32.gmra.mrb[0].mxu0 %v678
        %v801 = vpop.f32.mrb[0].mxu0
        %v802 = vadd.f32 0.0, %v801
        %v803 = vpop.f32.mrb[0].mxu0
        %804 = vmatprep.mubr.f32.mxu0 0.0
        %805 = vmatmul.mubr.f32.gmra.mrb[0].mxu0 %v681
        %v806 = vpop.f32.mrb[0].mxu0
        %v807 = vadd.f32 0.0, %v806
        %v808 = vpop.f32.mrb[0].mxu0
        %809 = vmatprep.mubr.f32.mxu0 0.0
        %810 = vmatmul.mubr.f32.gmra.mrb[0].mxu0 %v684
        %v811 = vpop.f32.mrb[0].mxu0
        %v812 = vadd.f32 0.0, %v811
        %v813 = vpop.f32.mrb[0].mxu0
        %814 = vmatprep.mubr.f32.mxu0 0.0
        %815 = vmatmul.mubr.f32.gmra.mrb[0].mxu0 %v687
        %v816 = vpop.f32.mrb[0].mxu0
        %v817 = vadd.f32 0.0, %v816
        %v818 = vpop.f32.mrb[0].mxu0
        %819 = vmatprep.mubr.f32.mxu0 0.0
        %820 = vmatmul.mubr.f32.gmra.mrb[0].mxu0 %v690
        %v821 = vpop.f32.mrb[0].mxu0
        %v822 = vadd.f32 0.0, %v821
        %v823 = vpop.f32.mrb[0].mxu0
        %824 = vmatprep.mubr.f32.mxu0 0.0
        %825 = vmatmul.mubr.f32.gmra.mrb[0].mxu0 %v693
        %v826 = vpop.f32.mrb[0].mxu0
        %v827 = vadd.f32 0.0, %v826
        %v828 = vpop.f32.mrb[0].mxu0
        %829 = vmatprep.mubr.f32.mxu0 0.0
        %830 = vmatmul.mubr.f32.gmra.mrb[0].mxu0 %v696
        %v831 = vpop.f32.mrb[0].mxu0
        %v832 = vadd.f32 0.0, %v831
        %v833 = vpop.f32.mrb[0].mxu0
        %834 = vmatprep.mubr.f32.mxu0 0.0
        %835 = vmatmul.mubr.f32.gmra.mrb[0].mxu0 %v699
        %v836 = vpop.f32.mrb[0].mxu0
        %v837 = vadd.f32 0.0, %v836
        %v838 = vpop.f32.mrb[0].mxu0
        %839 = vmatprep.mubr.f32.mxu0 0.0
        %840 = vmatmul.mubr.f32.gmra.mrb[0].mxu0 %v702
        %v841 = vpop.f32.mrb[0].mxu0
        %v842 = vadd.f32 0.0, %v841
        %v843 = vpop.f32.mrb[0].mxu0
        %844 = vmatprep.mubr.f32.mxu0 0.0
        %845 = vmatmul.mubr.f32.gmra.mrb[0].mxu0 %v705
        %v846 = vpop.f32.mrb[0].mxu0
        %v847 = vadd.f32 0.0, %v846
        %v848 = vpop.f32.mrb[0].mxu0
        %849 = vmatprep.mubr.f32.mxu0 0.0
        %850 = vmatmul.mubr.f32.gmra.mrb[0].mxu0 %v708
        %v851 = vpop.f32.mrb[0].mxu0
        %v852 = vadd.f32 0.0, %v851
        %v853 = vpop.f32.mrb[0].mxu0
        %854 = vdwg.mxu0
        %vm855 = vcmask 523264
        %v857 = vsel %vm855, %v619, 0
        %v860 = vsel %vm855, %v620, 0
        %v863 = vsel %vm855, %v621, 0
        %v866 = vsel %vm855, %v622, 0
        %v869 = vsel %vm855, %v623, 0
        %v872 = vsel %vm855, %v624, 0
        %v875 = vsel %vm855, %v625, 0
        %v878 = vsel %vm855, %v626, 0
        %v881 = vsel %vm855, %v627, 0
        %v884 = vsel %vm855, %v628, 0
        %v887 = vsel %vm855, %v629, 0
        %v890 = vsel %vm855, %v630, 0
        %v893 = vsel %vm855, %v631, 0
        %v896 = vsel %vm855, %v632, 0
        %v899 = vsel %vm855, %v633, 0
        %v902 = vsel %vm855, %v634, 0
        %904 = vmatprep.subr.mxu0 0.0
        %905 = vmatpush1.msra.mxu0 %v635
        %906 = vmatprep.subr.mxu0 0.0
        %907 = vmatpush1.msra.mxu0 %v636
        %908 = vmatprep.subr.mxu0 0.0
        %909 = vmatpush1.msra.mxu0 %v637
        %910 = vmatprep.subr.mxu0 0.0
        %911 = vmatpush1.msra.mxu0 %v638
        %912 = vmatprep.subr.mxu0 0.0
        %913 = vmatpush1.msra.mxu0 %v639
        %914 = vmatprep.subr.mxu0 0.0
        %915 = vmatpush1.msra.mxu0 %v640
        %916 = vmatprep.subr.mxu0 0.0
        %917 = vmatpush1.msra.mxu0 %v641
        %918 = vmatprep.subr.mxu0 0.0
        %919 = vmatpush1.msra.mxu0 %v642
        %920 = vmatprep.subr.mxu0 0.0
        %921 = vmatpush1.msra.mxu0 0.0
        %922 = vmatprep.subr.mxu0 0.0
        %923 = vmatpush1.msra.mxu0 0.0
        %924 = vmatprep.subr.mxu0 0.0
        %925 = vmatpush1.msra.mxu0 0.0
        %926 = vmatprep.subr.mxu0 0.0
        %927 = vmatpush1.msra.mxu0 0.0
        %928 = vmatprep.subr.mxu0 0.0
        %929 = vmatpush1.msra.mxu0 0.0
        %930 = vmatprep.subr.mxu0 0.0
        %931 = vmatpush1.msra.mxu0 0.0
        %932 = vmatprep.subr.mxu0 0.0
        %933 = vmatpush1.msra.mxu0 0.0
        %934 = vmatprep.subr.mxu0 0.0
        %935 = vmatpush1.msra.mxu0 0.0
        %936 = vmatprep.subr.mxu0 0.0
        %937 = vmatpush1.msra.mxu0 0.0
        %938 = vmatprep.subr.mxu0 0.0
        %939 = vmatpush1.msra.mxu0 0.0
        %940 = vmatprep.subr.mxu0 0.0
        %941 = vmatpush1.msra.mxu0 0.0
        %942 = vmatprep.subr.mxu0 0.0
        %943 = vmatpush1.msra.mxu0 0.0
        %944 = vmatprep.subr.mxu0 0.0
        %945 = vmatpush1.msra.mxu0 0.0
        %946 = vmatprep.subr.mxu0 0.0
        %947 = vmatpush1.msra.mxu0 0.0
        %948 = vmatprep.subr.mxu0 0.0
        %949 = vmatpush1.msra.mxu0 0.0
        %950 = vmatprep.subr.mxu0 0.0
        %951 = vmatpush1.msra.mxu0 0.0
        %952 = vmatprep.subr.mxu0 0.0
        %953 = vmatpush1.msra.mxu0 0.0
        %954 = vmatprep.subr.mxu0 0.0
        %955 = vmatpush1.msra.mxu0 0.0
        %956 = vmatprep.subr.mxu0 0.0
        %957 = vmatpush1.msra.mxu0 0.0
        %958 = vmatprep.subr.mxu0 0.0
        %959 = vmatpush1.msra.mxu0 0.0
        %960 = vmatprep.subr.mxu0 0.0
        %961 = vmatpush1.msra.mxu0 0.0
        %962 = vmatprep.subr.mxu0 0.0
        %963 = vmatpush1.msra.mxu0 0.0
        %964 = vmatprep.subr.mxu0 0.0
        %965 = vmatpush1.msra.mxu0 0.0
        %966 = vmatprep.subr.mxu0 0.0
        %967 = vmatpush1.msra.mxu0 0.0
        %968 = vmatprep.mubr.f32.mxu0 0.0
        %969 = vmatmul.mubr.f32.gmra.mrb[0].mxu0 %v857
        %v970 = vpop.f32.mrb[0].mxu0
        %v971 = vadd.f32 %v777, %v970
        %v972 = vpop.f32.mrb[0].mxu0
        %973 = vmatprep.mubr.f32.mxu0 0.0
        %974 = vmatmul.mubr.f32.gmra.mrb[0].mxu0 %v860
        %v975 = vpop.f32.mrb[0].mxu0
        %v976 = vadd.f32 %v782, %v975
        %v977 = vpop.f32.mrb[0].mxu0
        %978 = vmatprep.mubr.f32.mxu0 0.0
        %979 = vmatmul.mubr.f32.gmra.mrb[0].mxu0 %v863
        %v980 = vpop.f32.mrb[0].mxu0
        %v981 = vadd.f32 %v787, %v980
        %v982 = vpop.f32.mrb[0].mxu0
        %983 = vmatprep.mubr.f32.mxu0 0.0
        %984 = vmatmul.mubr.f32.gmra.mrb[0].mxu0 %v866
        %v985 = vpop.f32.mrb[0].mxu0
        %v986 = vadd.f32 %v792, %v985
        %v987 = vpop.f32.mrb[0].mxu0
        %988 = vmatprep.mubr.f32.mxu0 0.0
        %989 = vmatmul.mubr.f32.gmra.mrb[0].mxu0 %v869
        %v990 = vpop.f32.mrb[0].mxu0
        %v991 = vadd.f32 %v797, %v990
        %v992 = vpop.f32.mrb[0].mxu0
        %993 = vmatprep.mubr.f32.mxu0 0.0
        %994 = vmatmul.mubr.f32.gmra.mrb[0].mxu0 %v872
        %v995 = vpop.f32.mrb[0].mxu0
        %v996 = vadd.f32 %v802, %v995
        %v997 = vpop.f32.mrb[0].mxu0
        %998 = vmatprep.mubr.f32.mxu0 0.0
        %999 = vmatmul.mubr.f32.gmra.mrb[0].mxu0 %v875
        %v1000 = vpop.f32.mrb[0].mxu0
        %v1001 = vadd.f32 %v807, %v1000
        %v1002 = vpop.f32.mrb[0].mxu0
        %1003 = vmatprep.mubr.f32.mxu0 0.0
        %1004 = vmatmul.mubr.f32.gmra.mrb[0].mxu0 %v878
        %v1005 = vpop.f32.mrb[0].mxu0
        %v1006 = vadd.f32 %v812, %v1005
        %v1007 = vpop.f32.mrb[0].mxu0
        %1008 = vmatprep.mubr.f32.mxu0 0.0
        %1009 = vmatmul.mubr.f32.gmra.mrb[0].mxu0 %v881
        %v1010 = vpop.f32.mrb[0].mxu0
        %v1011 = vadd.f32 %v817, %v1010
        %v1012 = vpop.f32.mrb[0].mxu0
        %1013 = vmatprep.mubr.f32.mxu0 0.0
        %1014 = vmatmul.mubr.f32.gmra.mrb[0].mxu0 %v884
        %v1015 = vpop.f32.mrb[0].mxu0
        %v1016 = vadd.f32 %v822, %v1015
        %v1017 = vpop.f32.mrb[0].mxu0
        %1018 = vmatprep.mubr.f32.mxu0 0.0
        %1019 = vmatmul.mubr.f32.gmra.mrb[0].mxu0 %v887
        %v1020 = vpop.f32.mrb[0].mxu0
        %v1021 = vadd.f32 %v827, %v1020
        %v1022 = vpop.f32.mrb[0].mxu0
        %1023 = vmatprep.mubr.f32.mxu0 0.0
        %1024 = vmatmul.mubr.f32.gmra.mrb[0].mxu0 %v890
        %v1025 = vpop.f32.mrb[0].mxu0
        %v1026 = vadd.f32 %v832, %v1025
        %v1027 = vpop.f32.mrb[0].mxu0
        %1028 = vmatprep.mubr.f32.mxu0 0.0
        %1029 = vmatmul.mubr.f32.gmra.mrb[0].mxu0 %v893
        %v1030 = vpop.f32.mrb[0].mxu0
        %v1031 = vadd.f32 %v837, %v1030
        %v1032 = vpop.f32.mrb[0].mxu0
        %1033 = vmatprep.mubr.f32.mxu0 0.0
        %1034 = vmatmul.mubr.f32.gmra.mrb[0].mxu0 %v896
        %v1035 = vpop.f32.mrb[0].mxu0
        %v1036 = vadd.f32 %v842, %v1035
        %v1037 = vpop.f32.mrb[0].mxu0
        %1038 = vmatprep.mubr.f32.mxu0 0.0
        %1039 = vmatmul.mubr.f32.gmra.mrb[0].mxu0 %v899
        %v1040 = vpop.f32.mrb[0].mxu0
        %v1041 = vadd.f32 %v847, %v1040
        %v1042 = vpop.f32.mrb[0].mxu0
        %1043 = vmatprep.mubr.f32.mxu0 0.0
        %1044 = vmatmul.mubr.f32.gmra.mrb[0].mxu0 %v902
        %v1045 = vpop.f32.mrb[0].mxu0
        %v1046 = vadd.f32 %v852, %v1045
        %v1047 = vpop.f32.mrb[0].mxu0
        %1048 = vdwg.mxu0
        %v1049 = vld [vmem:[%s6] sm:$0x1]
        %v1051 = vlaneseq
        %v1052 = vshrl.u32 %v1051, 7
        %v1053 = vsub.s32 0, %v1052
        %v1054 = vrot.slane %v1049, %v1053
        %v1056 = vadd.f32 %v971, %v1054
        %v1057 = vadd.f32 %v976, %v1054
        %v1058 = vadd.f32 %v981, %v1054
        %v1059 = vadd.f32 %v986, %v1054
        %v1060 = vadd.f32 %v991, %v1054
        %v1061 = vadd.f32 %v996, %v1054
        %v1062 = vadd.f32 %v1001, %v1054
        %v1063 = vadd.f32 %v1006, %v1054
        %v1064 = vadd.f32 %v1011, %v1054
        %v1065 = vadd.f32 %v1016, %v1054
        %v1066 = vadd.f32 %v1021, %v1054
        %v1067 = vadd.f32 %v1026, %v1054
        %v1068 = vadd.f32 %v1031, %v1054
        %v1069 = vadd.f32 %v1036, %v1054
        %v1070 = vadd.f32 %v1041, %v1054
        %v1071 = vadd.f32 %v1046, %v1054
        %v1072 = vmax.f32 %v1056, 0.0
        %v1073 = vmax.f32 %v1057, 0.0
        %v1074 = vmax.f32 %v1058, 0.0
        %v1075 = vmax.f32 %v1059, 0.0
        %v1076 = vmax.f32 %v1060, 0.0
        %v1077 = vmax.f32 %v1061, 0.0
        %v1078 = vmax.f32 %v1062, 0.0
        %v1079 = vmax.f32 %v1063, 0.0
        %v1080 = vmax.f32 %v1064, 0.0
        %v1081 = vmax.f32 %v1065, 0.0
        %v1082 = vmax.f32 %v1066, 0.0
        %v1083 = vmax.f32 %v1067, 0.0
        %v1084 = vmax.f32 %v1068, 0.0
        %v1085 = vmax.f32 %v1069, 0.0
        %v1086 = vmax.f32 %v1070, 0.0
        %v1087 = vmax.f32 %v1071, 0.0
        %v1088 = vld [vmem:[%s7] sm:$0xff]
        %v1089 = vld [vmem:[%s7 + $0x8] sm:$0xff]
        %v1090 = vld [vmem:[%s7 + $0x10] sm:$0xff]
        %v1091 = vld [vmem:[%s7 + $0x18] sm:$0xff]
        %v1092 = vld [vmem:[%s8] sm:$0x1]
        %v1094 = vlaneseq
        %v1095 = vshrl.u32 %v1094, 7
        %v1096 = vsub.s32 0, %v1095
        %v1097 = vrot.slane %v1092, %v1096
        %vm1099 = vcmask 261120
        %v1101 = vsel %vm1099, %v1072, 0
        %v1104 = vsel %vm1099, %v1073, 0
        %v1107 = vsel %vm1099, %v1074, 0
        %v1110 = vsel %vm1099, %v1075, 0
        %v1113 = vsel %vm1099, %v1076, 0
        %v1116 = vsel %vm1099, %v1077, 0
        %v1119 = vsel %vm1099, %v1078, 0
        %v1122 = vsel %vm1099, %v1079, 0
        %v1125 = vsel %vm1099, %v1080, 0
        %v1128 = vsel %vm1099, %v1081, 0
        %v1131 = vsel %vm1099, %v1082, 0
        %v1134 = vsel %vm1099, %v1083, 0
        %v1137 = vsel %vm1099, %v1084, 0
        %v1140 = vsel %vm1099, %v1085, 0
        %v1143 = vsel %vm1099, %v1086, 0
        %v1146 = vsel %vm1099, %v1087, 0
        %1148 = vmatprep.subr.mxu0 0.0
        %1149 = vmatpush1.msra.mxu0 %v1088
        %1150 = vmatprep.subr.mxu0 0.0
        %1151 = vmatpush1.msra.mxu0 %v1089
        %1152 = vmatprep.subr.mxu0 0.0
        %1153 = vmatpush1.msra.mxu0 %v1090
        %1154 = vmatprep.subr.mxu0 0.0
        %1155 = vmatpush1.msra.mxu0 %v1091
        %1156 = vmatprep.subr.mxu0 0.0
        %1157 = vmatpush1.msra.mxu0 0.0
        %1158 = vmatprep.subr.mxu0 0.0
        %1159 = vmatpush1.msra.mxu0 0.0
        %1160 = vmatprep.subr.mxu0 0.0
        %1161 = vmatpush1.msra.mxu0 0.0
        %1162 = vmatprep.subr.mxu0 0.0
        %1163 = vmatpush1.msra.mxu0 0.0
        %1164 = vmatprep.subr.mxu0 0.0
        %1165 = vmatpush1.msra.mxu0 0.0
        %1166 = vmatprep.subr.mxu0 0.0
        %1167 = vmatpush1.msra.mxu0 0.0
        %1168 = vmatprep.subr.mxu0 0.0
        %1169 = vmatpush1.msra.mxu0 0.0
        %1170 = vmatprep.subr.mxu0 0.0
        %1171 = vmatpush1.msra.mxu0 0.0
        %1172 = vmatprep.subr.mxu0 0.0
        %1173 = vmatpush1.msra.mxu0 0.0
        %1174 = vmatprep.subr.mxu0 0.0
        %1175 = vmatpush1.msra.mxu0 0.0
        %1176 = vmatprep.subr.mxu0 0.0
        %1177 = vmatpush1.msra.mxu0 0.0
        %1178 = vmatprep.subr.mxu0 0.0
        %1179 = vmatpush1.msra.mxu0 0.0
        %1180 = vmatprep.subr.mxu0 0.0
        %1181 = vmatpush1.msra.mxu0 0.0
        %1182 = vmatprep.subr.mxu0 0.0
        %1183 = vmatpush1.msra.mxu0 0.0
        %1184 = vmatprep.subr.mxu0 0.0
        %1185 = vmatpush1.msra.mxu0 0.0
        %1186 = vmatprep.subr.mxu0 0.0
        %1187 = vmatpush1.msra.mxu0 0.0
        %1188 = vmatprep.subr.mxu0 0.0
        %1189 = vmatpush1.msra.mxu0 0.0
        %1190 = vmatprep.subr.mxu0 0.0
        %1191 = vmatpush1.msra.mxu0 0.0
        %1192 = vmatprep.subr.mxu0 0.0
        %1193 = vmatpush1.msra.mxu0 0.0
        %1194 = vmatprep.subr.mxu0 0.0
        %1195 = vmatpush1.msra.mxu0 0.0
        %1196 = vmatprep.subr.mxu0 0.0
        %1197 = vmatpush1.msra.mxu0 0.0
        %1198 = vmatprep.subr.mxu0 0.0
        %1199 = vmatpush1.msra.mxu0 0.0
        %1200 = vmatprep.subr.mxu0 0.0
        %1201 = vmatpush1.msra.mxu0 0.0
        %1202 = vmatprep.subr.mxu0 0.0
        %1203 = vmatpush1.msra.mxu0 0.0
        %1204 = vmatprep.subr.mxu0 0.0
        %1205 = vmatpush1.msra.mxu0 0.0
        %1206 = vmatprep.subr.mxu0 0.0
        %1207 = vmatpush1.msra.mxu0 0.0
        %1208 = vmatprep.subr.mxu0 0.0
        %1209 = vmatpush1.msra.mxu0 0.0
        %1210 = vmatprep.subr.mxu0 0.0
        %1211 = vmatpush1.msra.mxu0 0.0
        %1212 = vmatprep.mubr.f32.mxu0 0.0
        %1213 = vmatmul.mubr.f32.gmra.mrb[0].mxu0 %v1101
        %v1214 = vpop.f32.mrb[0].mxu0
        %v1215 = vadd.f32 %v1097, %v1214
        %v1216 = vpop.f32.mrb[0].mxu0
        %1217 = vmatprep.mubr.f32.mxu0 0.0
        %1218 = vmatmul.mubr.f32.gmra.mrb[0].mxu0 %v1104
        %v1219 = vpop.f32.mrb[0].mxu0
        %v1220 = vadd.f32 %v1097, %v1219
        %v1221 = vpop.f32.mrb[0].mxu0
        %1222 = vmatprep.mubr.f32.mxu0 0.0
        %1223 = vmatmul.mubr.f32.gmra.mrb[0].mxu0 %v1107
        %v1224 = vpop.f32.mrb[0].mxu0
        %v1225 = vadd.f32 %v1097, %v1224
        %v1226 = vpop.f32.mrb[0].mxu0
        %1227 = vmatprep.mubr.f32.mxu0 0.0
        %1228 = vmatmul.mubr.f32.gmra.mrb[0].mxu0 %v1110
        %v1229 = vpop.f32.mrb[0].mxu0
        %v1230 = vadd.f32 %v1097, %v1229
        %v1231 = vpop.f32.mrb[0].mxu0
        %1232 = vmatprep.mubr.f32.mxu0 0.0
        %1233 = vmatmul.mubr.f32.gmra.mrb[0].mxu0 %v1113
        %v1234 = vpop.f32.mrb[0].mxu0
        %v1235 = vadd.f32 %v1097, %v1234
        %v1236 = vpop.f32.mrb[0].mxu0
        %1237 = vmatprep.mubr.f32.mxu0 0.0
        %1238 = vmatmul.mubr.f32.gmra.mrb[0].mxu0 %v1116
        %v1239 = vpop.f32.mrb[0].mxu0
        %v1240 = vadd.f32 %v1097, %v1239
        %v1241 = vpop.f32.mrb[0].mxu0
        %1242 = vmatprep.mubr.f32.mxu0 0.0
        %1243 = vmatmul.mubr.f32.gmra.mrb[0].mxu0 %v1119
        %v1244 = vpop.f32.mrb[0].mxu0
        %v1245 = vadd.f32 %v1097, %v1244
        %v1246 = vpop.f32.mrb[0].mxu0
        %1247 = vmatprep.mubr.f32.mxu0 0.0
        %1248 = vmatmul.mubr.f32.gmra.mrb[0].mxu0 %v1122
        %v1249 = vpop.f32.mrb[0].mxu0
        %v1250 = vadd.f32 %v1097, %v1249
        %v1251 = vpop.f32.mrb[0].mxu0
        %1252 = vmatprep.mubr.f32.mxu0 0.0
        %1253 = vmatmul.mubr.f32.gmra.mrb[0].mxu0 %v1125
        %v1254 = vpop.f32.mrb[0].mxu0
        %v1255 = vadd.f32 %v1097, %v1254
        %v1256 = vpop.f32.mrb[0].mxu0
        %1257 = vmatprep.mubr.f32.mxu0 0.0
        %1258 = vmatmul.mubr.f32.gmra.mrb[0].mxu0 %v1128
        %v1259 = vpop.f32.mrb[0].mxu0
        %v1260 = vadd.f32 %v1097, %v1259
        %v1261 = vpop.f32.mrb[0].mxu0
        %1262 = vmatprep.mubr.f32.mxu0 0.0
        %1263 = vmatmul.mubr.f32.gmra.mrb[0].mxu0 %v1131
        %v1264 = vpop.f32.mrb[0].mxu0
        %v1265 = vadd.f32 %v1097, %v1264
        %v1266 = vpop.f32.mrb[0].mxu0
        %1267 = vmatprep.mubr.f32.mxu0 0.0
        %1268 = vmatmul.mubr.f32.gmra.mrb[0].mxu0 %v1134
        %v1269 = vpop.f32.mrb[0].mxu0
        %v1270 = vadd.f32 %v1097, %v1269
        %v1271 = vpop.f32.mrb[0].mxu0
        %1272 = vmatprep.mubr.f32.mxu0 0.0
        %1273 = vmatmul.mubr.f32.gmra.mrb[0].mxu0 %v1137
        %v1274 = vpop.f32.mrb[0].mxu0
        %v1275 = vadd.f32 %v1097, %v1274
        %v1276 = vpop.f32.mrb[0].mxu0
        %1277 = vmatprep.mubr.f32.mxu0 0.0
        %1278 = vmatmul.mubr.f32.gmra.mrb[0].mxu0 %v1140
        %v1279 = vpop.f32.mrb[0].mxu0
        %v1280 = vadd.f32 %v1097, %v1279
        %v1281 = vpop.f32.mrb[0].mxu0
        %1282 = vmatprep.mubr.f32.mxu0 0.0
        %1283 = vmatmul.mubr.f32.gmra.mrb[0].mxu0 %v1143
        %v1284 = vpop.f32.mrb[0].mxu0
        %v1285 = vadd.f32 %v1097, %v1284
        %v1286 = vpop.f32.mrb[0].mxu0
        %1287 = vmatprep.mubr.f32.mxu0 0.0
        %1288 = vmatmul.mubr.f32.gmra.mrb[0].mxu0 %v1146
        %v1289 = vpop.f32.mrb[0].mxu0
        %v1290 = vadd.f32 %v1097, %v1289
        %v1291 = vpop.f32.mrb[0].mxu0
        %1292 = vdwg.mxu0
        %vm1293 = vcmask 113664
        %v1294 = vsel %vm1293, %v1215, -inf
        %1295 = vmax.xlane.f32.xlu0 %v1294
        %v1296 = vpop.xlane.xlu0 %1295
        %v1297 = vsel %vm1293, %v1220, -inf
        %1298 = vmax.xlane.f32.xlu0 %v1297
        %v1299 = vpop.xlane.xlu0 %1298
        %v1300 = vsel %vm1293, %v1225, -inf
        %1301 = vmax.xlane.f32.xlu0 %v1300
        %v1302 = vpop.xlane.xlu0 %1301
        %v1303 = vsel %vm1293, %v1230, -inf
        %1304 = vmax.xlane.f32.xlu0 %v1303
        %v1305 = vpop.xlane.xlu0 %1304
        %v1306 = vsel %vm1293, %v1235, -inf
        %1307 = vmax.xlane.f32.xlu0 %v1306
        %v1308 = vpop.xlane.xlu0 %1307
        %v1309 = vsel %vm1293, %v1240, -inf
        %1310 = vmax.xlane.f32.xlu0 %v1309
        %v1311 = vpop.xlane.xlu0 %1310
        %v1312 = vsel %vm1293, %v1245, -inf
        %1313 = vmax.xlane.f32.xlu0 %v1312
        %v1314 = vpop.xlane.xlu0 %1313
        %v1315 = vsel %vm1293, %v1250, -inf
        %1316 = vmax.xlane.f32.xlu0 %v1315
        %v1317 = vpop.xlane.xlu0 %1316
        %v1318 = vsel %vm1293, %v1255, -inf
        %1319 = vmax.xlane.f32.xlu0 %v1318
        %v1320 = vpop.xlane.xlu0 %1319
        %v1321 = vsel %vm1293, %v1260, -inf
        %1322 = vmax.xlane.f32.xlu0 %v1321
        %v1323 = vpop.xlane.xlu0 %1322
        %v1324 = vsel %vm1293, %v1265, -inf
        %1325 = vmax.xlane.f32.xlu0 %v1324
        %v1326 = vpop.xlane.xlu0 %1325
        %v1327 = vsel %vm1293, %v1270, -inf
        %1328 = vmax.xlane.f32.xlu0 %v1327
        %v1329 = vpop.xlane.xlu0 %1328
        %v1330 = vsel %vm1293, %v1275, -inf
        %1331 = vmax.xlane.f32.xlu0 %v1330
        %v1332 = vpop.xlane.xlu0 %1331
        %v1333 = vsel %vm1293, %v1280, -inf
        %1334 = vmax.xlane.f32.xlu0 %v1333
        %v1335 = vpop.xlane.xlu0 %1334
        %v1336 = vsel %vm1293, %v1285, -inf
        %1337 = vmax.xlane.f32.xlu0 %v1336
        %v1338 = vpop.xlane.xlu0 %1337
        %v1339 = vsel %vm1293, %v1290, -inf
        %1340 = vmax.xlane.f32.xlu0 %v1339
        %v1341 = vpop.xlane.xlu0 %1340
        %v1342 = vsub.f32 %v1215, %v1296
        %v1343 = vsub.f32 %v1220, %v1299
        %v1344 = vsub.f32 %v1225, %v1302
        %v1345 = vsub.f32 %v1230, %v1305
        %v1346 = vsub.f32 %v1235, %v1308
        %v1347 = vsub.f32 %v1240, %v1311
        %v1348 = vsub.f32 %v1245, %v1314
        %v1349 = vsub.f32 %v1250, %v1317
        %v1350 = vsub.f32 %v1255, %v1320
        %v1351 = vsub.f32 %v1260, %v1323
        %v1352 = vsub.f32 %v1265, %v1326
        %v1353 = vsub.f32 %v1270, %v1329
        %v1354 = vsub.f32 %v1275, %v1332
        %v1355 = vsub.f32 %v1280, %v1335
        %v1356 = vsub.f32 %v1285, %v1338
        %v1357 = vsub.f32 %v1290, %v1341
        %v1358 = vmul.f32 %v1342, 1.442695
        %v1359 = vpow.pop %v1358
        %v1360 = vmul.f32 %v1343, 1.442695
        %v1361 = vpow.pop %v1360
        %v1362 = vmul.f32 %v1344, 1.442695
        %v1363 = vpow.pop %v1362
        %v1364 = vmul.f32 %v1345, 1.442695
        %v1365 = vpow.pop %v1364
        %v1366 = vmul.f32 %v1346, 1.442695
        %v1367 = vpow.pop %v1366
        %v1368 = vmul.f32 %v1347, 1.442695
        %v1369 = vpow.pop %v1368
        %v1370 = vmul.f32 %v1348, 1.442695
        %v1371 = vpow.pop %v1370
        %v1372 = vmul.f32 %v1349, 1.442695
        %v1373 = vpow.pop %v1372
        %v1374 = vmul.f32 %v1350, 1.442695
        %v1375 = vpow.pop %v1374
        %v1376 = vmul.f32 %v1351, 1.442695
        %v1377 = vpow.pop %v1376
        %v1378 = vmul.f32 %v1352, 1.442695
        %v1379 = vpow.pop %v1378
        %v1380 = vmul.f32 %v1353, 1.442695
        %v1381 = vpow.pop %v1380
        %v1382 = vmul.f32 %v1354, 1.442695
        %v1383 = vpow.pop %v1382
        %v1384 = vmul.f32 %v1355, 1.442695
        %v1385 = vpow.pop %v1384
        %v1386 = vmul.f32 %v1356, 1.442695
        %v1387 = vpow.pop %v1386
        %v1388 = vmul.f32 %v1357, 1.442695
        %v1389 = vpow.pop %v1388
        %v1390 = vsel %vm1293, %v1359, 0.0
        %1391 = vadd.xlane.f32.xlu0 %v1390
        %v1392 = vpop.xlane.xlu0 %1391
        %v1393 = vsel %vm1293, %v1361, 0.0
        %1394 = vadd.xlane.f32.xlu0 %v1393
        %v1395 = vpop.xlane.xlu0 %1394
        %v1396 = vsel %vm1293, %v1363, 0.0
        %1397 = vadd.xlane.f32.xlu0 %v1396
        %v1398 = vpop.xlane.xlu0 %1397
        %v1399 = vsel %vm1293, %v1365, 0.0
        %1400 = vadd.xlane.f32.xlu0 %v1399
        %v1401 = vpop.xlane.xlu0 %1400
        %v1402 = vsel %vm1293, %v1367, 0.0
        %1403 = vadd.xlane.f32.xlu0 %v1402
        %v1404 = vpop.xlane.xlu0 %1403
        %v1405 = vsel %vm1293, %v1369, 0.0
        %1406 = vadd.xlane.f32.xlu0 %v1405
        %v1407 = vpop.xlane.xlu0 %1406
        %v1408 = vsel %vm1293, %v1371, 0.0
        %1409 = vadd.xlane.f32.xlu0 %v1408
        %v1410 = vpop.xlane.xlu0 %1409
        %v1411 = vsel %vm1293, %v1373, 0.0
        %1412 = vadd.xlane.f32.xlu0 %v1411
        %v1413 = vpop.xlane.xlu0 %1412
        %v1414 = vsel %vm1293, %v1375, 0.0
        %1415 = vadd.xlane.f32.xlu0 %v1414
        %v1416 = vpop.xlane.xlu0 %1415
        %v1417 = vsel %vm1293, %v1377, 0.0
        %1418 = vadd.xlane.f32.xlu0 %v1417
        %v1419 = vpop.xlane.xlu0 %1418
        %v1420 = vsel %vm1293, %v1379, 0.0
        %1421 = vadd.xlane.f32.xlu0 %v1420
        %v1422 = vpop.xlane.xlu0 %1421
        %v1423 = vsel %vm1293, %v1381, 0.0
        %1424 = vadd.xlane.f32.xlu0 %v1423
        %v1425 = vpop.xlane.xlu0 %1424
        %v1426 = vsel %vm1293, %v1383, 0.0
        %1427 = vadd.xlane.f32.xlu0 %v1426
        %v1428 = vpop.xlane.xlu0 %1427
        %v1429 = vsel %vm1293, %v1385, 0.0
        %1430 = vadd.xlane.f32.xlu0 %v1429
        %v1431 = vpop.xlane.xlu0 %1430
        %v1432 = vsel %vm1293, %v1387, 0.0
        %1433 = vadd.xlane.f32.xlu0 %v1432
        %v1434 = vpop.xlane.xlu0 %1433
        %v1435 = vsel %vm1293, %v1389, 0.0
        %1436 = vadd.xlane.f32.xlu0 %v1435
        %v1437 = vpop.xlane.xlu0 %1436
        %v1438 = vlog2.pop %v1392
        %v1439 = vmul.f32 %v1438, 0.6931472
        %v1440 = vlog2.pop %v1395
        %v1441 = vmul.f32 %v1440, 0.6931472
        %v1442 = vlog2.pop %v1398
        %v1443 = vmul.f32 %v1442, 0.6931472
        %v1444 = vlog2.pop %v1401
        %v1445 = vmul.f32 %v1444, 0.6931472
        %v1446 = vlog2.pop %v1404
        %v1447 = vmul.f32 %v1446, 0.6931472
        %v1448 = vlog2.pop %v1407
        %v1449 = vmul.f32 %v1448, 0.6931472
        %v1450 = vlog2.pop %v1410
        %v1451 = vmul.f32 %v1450, 0.6931472
        %v1452 = vlog2.pop %v1413
        %v1453 = vmul.f32 %v1452, 0.6931472
        %v1454 = vlog2.pop %v1416
        %v1455 = vmul.f32 %v1454, 0.6931472
        %v1456 = vlog2.pop %v1419
        %v1457 = vmul.f32 %v1456, 0.6931472
        %v1458 = vlog2.pop %v1422
        %v1459 = vmul.f32 %v1458, 0.6931472
        %v1460 = vlog2.pop %v1425
        %v1461 = vmul.f32 %v1460, 0.6931472
        %v1462 = vlog2.pop %v1428
        %v1463 = vmul.f32 %v1462, 0.6931472
        %v1464 = vlog2.pop %v1431
        %v1465 = vmul.f32 %v1464, 0.6931472
        %v1466 = vlog2.pop %v1434
        %v1467 = vmul.f32 %v1466, 0.6931472
        %v1468 = vlog2.pop %v1437
        %v1469 = vmul.f32 %v1468, 0.6931472
        %v1470 = vsub.f32 %v1342, %v1439
        %v1471 = vsub.f32 %v1343, %v1441
        %v1472 = vsub.f32 %v1344, %v1443
        %v1473 = vsub.f32 %v1345, %v1445
        %v1474 = vsub.f32 %v1346, %v1447
        %v1475 = vsub.f32 %v1347, %v1449
        %v1476 = vsub.f32 %v1348, %v1451
        %v1477 = vsub.f32 %v1349, %v1453
        %v1478 = vsub.f32 %v1350, %v1455
        %v1479 = vsub.f32 %v1351, %v1457
        %v1480 = vsub.f32 %v1352, %v1459
        %v1481 = vsub.f32 %v1353, %v1461
        %v1482 = vsub.f32 %v1354, %v1463
        %v1483 = vsub.f32 %v1355, %v1465
        %v1484 = vsub.f32 %v1356, %v1467
        %v1485 = vsub.f32 %v1357, %v1469
        %1486 = vst.msk [vmem:[%s362] sm:$0xff] %vm1293, %v1470
        %1487 = vst.msk [vmem:[%s362 + $0x8] sm:$0xff] %vm1293, %v1471
        %1488 = vst.msk [vmem:[%s362 + $0x10] sm:$0xff] %vm1293, %v1472
        %1489 = vst.msk [vmem:[%s362 + $0x18] sm:$0xff] %vm1293, %v1473
        %1490 = vst.msk [vmem:[%s362 + $0x20] sm:$0xff] %vm1293, %v1474
        %1491 = vst.msk [vmem:[%s362 + $0x28] sm:$0xff] %vm1293, %v1475
        %1492 = vst.msk [vmem:[%s362 + $0x30] sm:$0xff] %vm1293, %v1476
        %1493 = vst.msk [vmem:[%s362 + $0x38] sm:$0xff] %vm1293, %v1477
        %1494 = vst.msk [vmem:[%s362 + $0x40] sm:$0xff] %vm1293, %v1478
        %1495 = vst.msk [vmem:[%s362 + $0x48] sm:$0xff] %vm1293, %v1479
        %1496 = vst.msk [vmem:[%s362 + $0x50] sm:$0xff] %vm1293, %v1480
        %1497 = vst.msk [vmem:[%s362 + $0x58] sm:$0xff] %vm1293, %v1481
        %1498 = vst.msk [vmem:[%s362 + $0x60] sm:$0xff] %vm1293, %v1482
        %1499 = vst.msk [vmem:[%s362 + $0x68] sm:$0xff] %vm1293, %v1483
        %1500 = vst.msk [vmem:[%s362 + $0x70] sm:$0xff] %vm1293, %v1484
        %1501 = vst.msk [vmem:[%s362 + $0x78] sm:$0xff] %vm1293, %v1485
        %s1502 = sand.u32 %s227, 1
        %s1503 = sand.u32 %s227, 1
        %s1504 = smul.addr %s1503, 128
        %s1505 = scalar_lea.vmem [#allocation2], %s1504
        // Predicated region
        $region57: #{tpu_custom_call.1} parent=55 // pred_check
          %p1506 = pneg %p237
        $region58: #{tpu_custom_call.1} parent=55 // pred_check_branch
          %1508 = sbr.rel (%p1506) target = $region60
        $region59: #{tpu_custom_call.1} parent=55 // pred_region
          %s1509 = smul.u32 16, %s20
          %s1510 = ssub.s32 38, %s1509
          %p1511 = scmp.lt.s32.totalorder %s1510, 16
          %s1512 = scalar_select %p1511, %s1510, 16
          %s1513 = smul.u32 128, %s1512
          %p1514 = scmp.ne.s32.totalorder 0, %s1513
          %s1515 = smul.addr %s1509, 8
          %s1516 = scalar_lea.vmem %s9, %s1515
          // Predicated region
          $region61: #{tpu_custom_call.1} parent=59 // pred_check
            %p1517 = pneg %p1514
          $region62: #{tpu_custom_call.1} parent=59 // pred_check_branch
            %1519 = sbr.rel (%p1517) target = $region64
          $region63: #{tpu_custom_call.1} parent=59 // pred_region
            // Predicated region
            $region65: #{tpu_custom_call.1} parent=63 // pred_check
              _
            $region66: #{tpu_custom_call.1} parent=63 // pred_check_branch
              %1521 = sbr.rel (0) target = $region68
            $region67: #{tpu_custom_call.1} parent=63 // pred_region
              // Predicated region
              $region87: #{tpu_custom_call.1} parent=67 // pred_check
                _
              $region88: #{tpu_custom_call.1} parent=67 // pred_check_branch
                %1600 = sbr.rel (0) target = $region90
              $region89: #{tpu_custom_call.1} parent=67 // pred_region
                %s1601 = sshrl.u32 %s1512, 4
                // While loop
                $region91: #{tpu_custom_call.1} parent=89 // loop_pre_header
                  _
                $region92: #{tpu_custom_call.1} parent=89 // loop_header
                  %s1603 = sphi 0, %s1605
                  %p1604 = scmp.ge.s32.totalorder %s1603, %s1601
                  %s1608 = sphi 0, %s1645
                  %s1609 = sphi %s1505, %s1648
                  %s1610 = sphi %s1516, %s1649
                $region93: #{tpu_custom_call.1} parent=89 // loop_header_branch
                  %1607 = sbr.rel (%p1604) target = $region97
                $region94: #{tpu_custom_call.1} parent=89 // loop_body
                  %v1611 = vld [vmem:[%s1609] sm:$0xff]
                  %1612 = vst [vmem:[%s1610] sm:$0xff] %v1611
                  %v1613 = vld [vmem:[%s1609 + $0x8] sm:$0xff]
                  %1614 = vst [vmem:[%s1610 + $0x8] sm:$0xff] %v1613
                  %v1615 = vld [vmem:[%s1609 + $0x10] sm:$0xff]
                  %1616 = vst [vmem:[%s1610 + $0x10] sm:$0xff] %v1615
                  %v1617 = vld [vmem:[%s1609 + $0x18] sm:$0xff]
                  %1618 = vst [vmem:[%s1610 + $0x18] sm:$0xff] %v1617
                  %v1619 = vld [vmem:[%s1609 + $0x20] sm:$0xff]
                  %1620 = vst [vmem:[%s1610 + $0x20] sm:$0xff] %v1619
                  %v1621 = vld [vmem:[%s1609 + $0x28] sm:$0xff]
                  %1622 = vst [vmem:[%s1610 + $0x28] sm:$0xff] %v1621
                  %v1623 = vld [vmem:[%s1609 + $0x30] sm:$0xff]
                  %1624 = vst [vmem:[%s1610 + $0x30] sm:$0xff] %v1623
                  %v1625 = vld [vmem:[%s1609 + $0x38] sm:$0xff]
                  %1626 = vst [vmem:[%s1610 + $0x38] sm:$0xff] %v1625
                  %v1627 = vld [vmem:[%s1609 + $0x40] sm:$0xff]
                  %1628 = vst [vmem:[%s1610 + $0x40] sm:$0xff] %v1627
                  %v1629 = vld [vmem:[%s1609 + $0x48] sm:$0xff]
                  %1630 = vst [vmem:[%s1610 + $0x48] sm:$0xff] %v1629
                  %v1631 = vld [vmem:[%s1609 + $0x50] sm:$0xff]
                  %1632 = vst [vmem:[%s1610 + $0x50] sm:$0xff] %v1631
                  %v1633 = vld [vmem:[%s1609 + $0x58] sm:$0xff]
                  %1634 = vst [vmem:[%s1610 + $0x58] sm:$0xff] %v1633
                  %v1635 = vld [vmem:[%s1609 + $0x60] sm:$0xff]
                  %1636 = vst [vmem:[%s1610 + $0x60] sm:$0xff] %v1635
                  %v1637 = vld [vmem:[%s1609 + $0x68] sm:$0xff]
                  %1638 = vst [vmem:[%s1610 + $0x68] sm:$0xff] %v1637
                  %v1639 = vld [vmem:[%s1609 + $0x70] sm:$0xff]
                  %1640 = vst [vmem:[%s1610 + $0x70] sm:$0xff] %v1639
                  %v1641 = vld [vmem:[%s1609 + $0x78] sm:$0xff]
                  %1642 = vst [vmem:[%s1610 + $0x78] sm:$0xff] %v1641
                  %s1643 = sadd.s32 1, %s1608
                  %p1644 = scmp.ge.s32.totalorder %s1643, %s1601
                  %s1645 = scalar_select %p1644, 0, %s1643
                  %s1646 = smul.u32 %s1645, 128
                  %s1647 = smul.u32 %s1645, 128
                  %s1648 = scalar_lea.vmem %s1505, %s1646 [#allocation2]
                  %s1649 = scalar_lea.vmem %s1516, %s1647
                $region95: #{tpu_custom_call.1} parent=89 // loop_footer
                  %s1605 = sadd.s32 %s1603, 1
                $region96: #{tpu_custom_call.1} parent=89 // loop_footer_branch
                  %1602 = sbr.rel target = $region92
                $region97: #{tpu_custom_call.1} parent=89 // loop_exit
                  _
                %s1650 = sshrl.u32 %s1512, 4
                %s1651 = sand.u32 %s1512, 15
                %s1652 = smul.u32 %s1650, 16
                %s1653 = smul.u32 8, %s1652
                %s1654 = scalar_lea.vmem %s1505, %s1653 [#allocation2]
                %s1655 = smul.u32 8, %s1652
                %s1656 = scalar_lea.vmem %s1516, %s1655
                // While loop
                $region98: #{tpu_custom_call.1} parent=89 // loop_pre_header
                  _
                $region99: #{tpu_custom_call.1} parent=89 // loop_header
                  %s1658 = sphi 0, %s1660
                  %p1659 = scmp.ge.s32.totalorder %s1658, %s1651
                  %s1663 = sphi 0, %s1670
                  %s1664 = sphi %s1654, %s1673
                  %s1665 = sphi %s1656, %s1674
                $region100: #{tpu_custom_call.1} parent=89 // loop_header_branch
                  %1662 = sbr.rel (%p1659) target = $region104
                $region101: #{tpu_custom_call.1} parent=89 // loop_body
                  %v1666 = vld [vmem:[%s1664] sm:$0xff]
                  %1667 = vst [vmem:[%s1665] sm:$0xff] %v1666
                  %s1668 = sadd.s32 1, %s1663
                  %p1669 = scmp.ge.s32.totalorder %s1668, %s1651
                  %s1670 = scalar_select %p1669, 0, %s1668
                  %s1671 = smul.u32 %s1670, 8
                  %s1672 = smul.u32 %s1670, 8
                  %s1673 = scalar_lea.vmem %s1654, %s1671 [#allocation2]
                  %s1674 = scalar_lea.vmem %s1656, %s1672
                $region102: #{tpu_custom_call.1} parent=89 // loop_footer
                  %s1660 = sadd.s32 %s1658, 1
                $region103: #{tpu_custom_call.1} parent=89 // loop_footer_branch
                  %1657 = sbr.rel target = $region99
                $region104: #{tpu_custom_call.1} parent=89 // loop_exit
                  _
              $region90: #{tpu_custom_call.1} parent=67 // pred_fallthru
                _
              // Predicated region
              $region105: #{tpu_custom_call.1} parent=67 // pred_check
                _
              $region106: #{tpu_custom_call.1} parent=67 // pred_check_branch
                %1676 = sbr.rel target = $region108
              $region107: #{tpu_custom_call.1} parent=67 // pred_region
                _
              $region108: #{tpu_custom_call.1} parent=67 // pred_fallthru
                _
            $region68: #{tpu_custom_call.1} parent=63 // pred_fallthru
              _
            // Predicated region
            $region69: #{tpu_custom_call.1} parent=63 // pred_check
              _
            $region70: #{tpu_custom_call.1} parent=63 // pred_check_branch
              %1523 = sbr.rel target = $region72
            $region71: #{tpu_custom_call.1} parent=63 // pred_region
              %s1525 = sshrl.u32 %s1512, 4
              // While loop
              $region73: #{tpu_custom_call.1} parent=71 // loop_pre_header
                _
              $region74: #{tpu_custom_call.1} parent=71 // loop_header
                %s1527 = sphi 0, %s1529
                %p1528 = scmp.ge.s32.totalorder %s1527, %s1525
                %s1532 = sphi 0, %s1569
                %s1533 = sphi %s1505, %s1572
                %s1534 = sphi %s1516, %s1573
              $region75: #{tpu_custom_call.1} parent=71 // loop_header_branch
                %1531 = sbr.rel (%p1528) target = $region79
              $region76: #{tpu_custom_call.1} parent=71 // loop_body
                %v1535 = vld [vmem:[%s1533] sm:$0xff]
                %1536 = vst [vmem:[%s1534] sm:$0xff] %v1535
                %v1537 = vld [vmem:[%s1533 + $0x8] sm:$0xff]
                %1538 = vst [vmem:[%s1534 + $0x8] sm:$0xff] %v1537
                %v1539 = vld [vmem:[%s1533 + $0x10] sm:$0xff]
                %1540 = vst [vmem:[%s1534 + $0x10] sm:$0xff] %v1539
                %v1541 = vld [vmem:[%s1533 + $0x18] sm:$0xff]
                %1542 = vst [vmem:[%s1534 + $0x18] sm:$0xff] %v1541
                %v1543 = vld [vmem:[%s1533 + $0x20] sm:$0xff]
                %1544 = vst [vmem:[%s1534 + $0x20] sm:$0xff] %v1543
                %v1545 = vld [vmem:[%s1533 + $0x28] sm:$0xff]
                %1546 = vst [vmem:[%s1534 + $0x28] sm:$0xff] %v1545
                %v1547 = vld [vmem:[%s1533 + $0x30] sm:$0xff]
                %1548 = vst [vmem:[%s1534 + $0x30] sm:$0xff] %v1547
                %v1549 = vld [vmem:[%s1533 + $0x38] sm:$0xff]
                %1550 = vst [vmem:[%s1534 + $0x38] sm:$0xff] %v1549
                %v1551 = vld [vmem:[%s1533 + $0x40] sm:$0xff]
                %1552 = vst [vmem:[%s1534 + $0x40] sm:$0xff] %v1551
                %v1553 = vld [vmem:[%s1533 + $0x48] sm:$0xff]
                %1554 = vst [vmem:[%s1534 + $0x48] sm:$0xff] %v1553
                %v1555 = vld [vmem:[%s1533 + $0x50] sm:$0xff]
                %1556 = vst [vmem:[%s1534 + $0x50] sm:$0xff] %v1555
                %v1557 = vld [vmem:[%s1533 + $0x58] sm:$0xff]
                %1558 = vst [vmem:[%s1534 + $0x58] sm:$0xff] %v1557
                %v1559 = vld [vmem:[%s1533 + $0x60] sm:$0xff]
                %1560 = vst [vmem:[%s1534 + $0x60] sm:$0xff] %v1559
                %v1561 = vld [vmem:[%s1533 + $0x68] sm:$0xff]
                %1562 = vst [vmem:[%s1534 + $0x68] sm:$0xff] %v1561
                %v1563 = vld [vmem:[%s1533 + $0x70] sm:$0xff]
                %1564 = vst [vmem:[%s1534 + $0x70] sm:$0xff] %v1563
                %v1565 = vld [vmem:[%s1533 + $0x78] sm:$0xff]
                %1566 = vst [vmem:[%s1534 + $0x78] sm:$0xff] %v1565
                %s1567 = sadd.s32 1, %s1532
                %p1568 = scmp.ge.s32.totalorder %s1567, %s1525
                %s1569 = scalar_select %p1568, 0, %s1567
                %s1570 = smul.u32 %s1569, 128
                %s1571 = smul.u32 %s1569, 128
                %s1572 = scalar_lea.vmem %s1505, %s1570 [#allocation2]
                %s1573 = scalar_lea.vmem %s1516, %s1571
              $region77: #{tpu_custom_call.1} parent=71 // loop_footer
                %s1529 = sadd.s32 %s1527, 1
              $region78: #{tpu_custom_call.1} parent=71 // loop_footer_branch
                %1526 = sbr.rel target = $region74
              $region79: #{tpu_custom_call.1} parent=71 // loop_exit
                _
              %s1574 = sshrl.u32 %s1512, 4
              %s1575 = sand.u32 %s1512, 15
              %s1576 = smul.u32 %s1574, 16
              %s1577 = smul.u32 8, %s1576
              %s1578 = scalar_lea.vmem %s1505, %s1577 [#allocation2]
              %s1579 = smul.u32 8, %s1576
              %s1580 = scalar_lea.vmem %s1516, %s1579
              // While loop
              $region80: #{tpu_custom_call.1} parent=71 // loop_pre_header
                _
              $region81: #{tpu_custom_call.1} parent=71 // loop_header
                %s1582 = sphi 0, %s1584
                %p1583 = scmp.ge.s32.totalorder %s1582, %s1575
                %s1587 = sphi 0, %s1594
                %s1588 = sphi %s1578, %s1597
                %s1589 = sphi %s1580, %s1598
              $region82: #{tpu_custom_call.1} parent=71 // loop_header_branch
                %1586 = sbr.rel (%p1583) target = $region86
              $region83: #{tpu_custom_call.1} parent=71 // loop_body
                %v1590 = vld [vmem:[%s1588] sm:$0xff]
                %1591 = vst [vmem:[%s1589] sm:$0xff] %v1590
                %s1592 = sadd.s32 1, %s1587
                %p1593 = scmp.ge.s32.totalorder %s1592, %s1575
                %s1594 = scalar_select %p1593, 0, %s1592
                %s1595 = smul.u32 %s1594, 8
                %s1596 = smul.u32 %s1594, 8
                %s1597 = scalar_lea.vmem %s1578, %s1595 [#allocation2]
                %s1598 = scalar_lea.vmem %s1580, %s1596
              $region84: #{tpu_custom_call.1} parent=71 // loop_footer
                %s1584 = sadd.s32 %s1582, 1
              $region85: #{tpu_custom_call.1} parent=71 // loop_footer_branch
                %1581 = sbr.rel target = $region81
              $region86: #{tpu_custom_call.1} parent=71 // loop_exit
                _
            $region72: #{tpu_custom_call.1} parent=63 // pred_fallthru
              _
          $region64: #{tpu_custom_call.1} parent=59 // pred_fallthru
            _
          %1677 = vnop
        $region60: #{tpu_custom_call.1} parent=55 // pred_fallthru
          _
      $region56: #{tpu_custom_call.1} parent=5 // pred_fallthru
        _
      %p1678 = scmp.le.s32.totalorder 2, %s15
      // Predicated region
      $region109: #{tpu_custom_call.1} parent=5 // pred_check
        %p1679 = pneg %p1678
      $region110: #{tpu_custom_call.1} parent=5 // pred_check_branch
        %1681 = sbr.rel (%p1679) target = $region112
      $region111: #{tpu_custom_call.1} parent=5 // pred_region
        %s1682 = ssub.s32 %s15, 2
        // Predicated region
        $region113: #{tpu_custom_call.1} parent=111 // pred_check
          %p1683 = pneg %p243
        $region114: #{tpu_custom_call.1} parent=111 // pred_check_branch
          %1685 = sbr.rel (%p1683) target = $region116
        $region115: #{tpu_custom_call.1} parent=111 // pred_region
          %s1686 = sand.u32 %s228, 1
          %s1687 = sand.u32 %s228, 1
          %s1688 = smul.addr %s1687, 128
          %s1689 = scalar_lea.vmem [#allocation2], %s1688
        $region116: #{tpu_custom_call.1} parent=111 // pred_fallthru
          _
      $region112: #{tpu_custom_call.1} parent=5 // pred_fallthru
        _
    $region6: #{tpu_custom_call.1} parent=1 // loop_footer
      %s19 = sadd.s32 1, %s15
    $region7: #{tpu_custom_call.1} parent=1 // loop_footer_branch
      %14 = sbr.rel target = $region3
    $region8: #{tpu_custom_call.1} parent=1 // loop_exit
      _

</llo_original>
